<compile_context>
chip_gen: v5e
topology: v5e:2x2
jax: 0.10.0
libtpu: 0.0.40
codegen_flags: <defaults>
</compile_context>

<pallas_src>
import jax
import jax.numpy as jnp
from jax.experimental import pallas as pl
from jax.experimental.pallas import tpu as pltpu


# Logical (PyTorch) layer dims and MXU-aligned padded dims used in-kernel.
DIMS = [(8, 256), (256, 516), (516, 256), (256, 128), (128, 1)]
D_IN_PAD = 16      # 8   -> 16  (zero-padded input features / W1 rows)
D_HID_PAD = 640    # 516 -> 640 (zero-padded hidden width for layers 2/3)
W5T_ROWS = 16      # W5^T (1,128) zero-padded to 16 rows (bf16 sublane aligned)


def _round_up(a, m):
    return -(-a // m) * m


def mlp_kernel(x_ref, wa_ref, wb_ref, wc_ref, bias_ref, o_ref):
    """One batch tile of the 5-layer MLP.

    x_ref    : (TM, 16)   bf16  input rows (features zero-padded 8 -> 16)
    wa_ref   : (656, 256) bf16  [ W1 (16,256) ; W3 (640,256) ]
    wb_ref   : (256, 640) bf16  W2 (516 output cols zero-padded to 640)
    wc_ref   : (272, 128) bf16  [ W4 (256,128) ; W5^T padded (16,128), row 0 real ]
    bias_ref : (8, 640)   f32   row i = bias of layer i+1 (zero-padded)
    o_ref    : (1, 1, TM) f32   lane-dense output row for this batch tile
    """
    f32 = jnp.float32
    bf16 = jnp.bfloat16

    x = x_ref[...]                                                      # (TM, 16)

    # Layer 1: (TM,16) @ (16,256) + b1 -> ReLU
    h = jnp.dot(x, wa_ref[0:16, :], preferred_element_type=f32)
    h = jnp.maximum(h + bias_ref[0:1, 0:256], 0.0)

    # Layer 2: (TM,256) @ (256,640) + b2 -> ReLU   (640 = padded 516)
    h = jnp.dot(h.astype(bf16), wb_ref[...], preferred_element_type=f32)
    h = jnp.maximum(h + bias_ref[1:2, 0:640], 0.0)

    # Layer 3: (TM,640) @ (640,256) + b3 -> ReLU
    h = jnp.dot(h.astype(bf16), wa_ref[16:656, :], preferred_element_type=f32)
    h = jnp.maximum(h + bias_ref[2:3, 0:256], 0.0)

    # Layer 4: (TM,256) @ (256,128) + b4 -> ReLU
    h = jnp.dot(h.astype(bf16), wc_ref[0:256, :], preferred_element_type=f32)
    h = jnp.maximum(h + bias_ref[3:4, 0:128], 0.0)

    # Layer 5 (head, no activation), lane-dense:
    #   transpose h4 (TM,128) -> (128,TM) on the XLU, then
    #   W5^T (16,128) @ (128,TM) -> (16,TM); only row 0 is real.
    h_t = h.T.astype(bf16)                                              # (128, TM)
    y = jnp.dot(wc_ref[256:272, :], h_t, preferred_element_type=f32)    # (16, TM)
    y = y[0:1, :] + bias_ref[4:5, 0:1]                                  # (1, TM)

    o_ref[...] = y[None].astype(o_ref.dtype)                            # (1,1,TM)


def init_params(key):
    """PyTorch-default-style init.  Weights stored as (in, out) = W.T."""
    params = []
    for fan_in, fan_out in DIMS:
        kw, kb, key = jax.random.split(key, 3)
        bound = 1.0 / (fan_in ** 0.5)
        w = jax.random.uniform(kw, (fan_in, fan_out), jnp.float32, -bound, bound)
        b = jax.random.uniform(kb, (1, fan_out), jnp.float32, -bound, bound)
        params.append((w, b))
    return params


def pack_params(params):
    """Zero-pad to MXU-aligned shapes and pack into 4 slabs (3 bf16 + 1 f32)."""
    (w1, b1), (w2, b2), (w3, b3), (w4, b4), (w5, b5) = params
    pad_h = D_HID_PAD - 516

    w1p = jnp.pad(w1, ((0, D_IN_PAD - 8), (0, 0)))             # (16, 256)
    w2p = jnp.pad(w2, ((0, 0), (0, pad_h)))                    # (256, 640)
    w3p = jnp.pad(w3, ((0, pad_h), (0, 0)))                    # (640, 256)
    w5t = jnp.pad(w5.T, ((0, W5T_ROWS - 1), (0, 0)))           # (16, 128), row 0 real

    slab_a = jnp.concatenate([w1p, w3p], axis=0).astype(jnp.bfloat16)   # (656, 256)
    slab_b = w2p.astype(jnp.bfloat16)                                   # (256, 640)
    slab_c = jnp.concatenate([w4, w5t], axis=0).astype(jnp.bfloat16)    # (272, 128)

    bias = jnp.zeros((8, D_HID_PAD), jnp.float32)
    bias = bias.at[0, 0:256].set(b1[0])
    bias = bias.at[1, 0:516].set(b2[0])
    bias = bias.at[2, 0:256].set(b3[0])
    bias = bias.at[3, 0:128].set(b4[0])
    bias = bias.at[4, 0:1].set(b5[0])
    return slab_a, slab_b, slab_c, bias


def mlp_forward(x, packed):
    """x: (B, 8) float.  Returns (B, 1) float32."""
    slab_a, slab_b, slab_c, bias = packed
    B, d_in = x.shape

    # Batch tiling:
    #  * small batches (<=512): one grid step, rows rounded to a multiple of 16
    #  * large batches: TM in [512, 1024] and ALWAYS >= 2 grid steps, so the
    #    "parallel" batch axis can shard across both v7x TensorCores.
    if B <= 512:
        TM = max(16, _round_up(B, 16))
    else:
        TM = min(1024, max(512, _round_up(-(-B // 2), 128)))
    B_pad = _round_up(B, TM)
    grid = (B_pad // TM,)

    # Pad features 8 -> 16 (exact: matching W1 rows are zero), pad batch rows,
    # and hand the kernel bf16 rows (halves the recurring per-step input DMA).
    x_p = jnp.pad(x.astype(jnp.float32),
                  ((0, B_pad - B), (0, D_IN_PAD - d_in))).astype(jnp.bfloat16)

    const = lambda i: (0, 0)
    flops = 2 * B_pad * (D_IN_PAD * 256 + 256 * D_HID_PAD
                         + D_HID_PAD * 256 + 256 * 128 + 128 * W5T_ROWS)
    bytes_accessed = (2 * (slab_a.size + slab_b.size + slab_c.size)
                      + 4 * bias.size + 2 * x_p.size + 4 * B_pad)

    out = pl.pallas_call(
        mlp_kernel,
        out_shape=jax.ShapeDtypeStruct((grid[0], 1, TM), jnp.float32),
        grid=grid,
        in_specs=[
            pl.BlockSpec((TM, D_IN_PAD), lambda i: (i, 0)),
            # Weight/bias slabs: constant index map -> fetched once, resident
            # in VMEM across all grid steps.
            pl.BlockSpec(slab_a.shape, const),
            pl.BlockSpec(slab_b.shape, const),
            pl.BlockSpec(slab_c.shape, const),
            pl.BlockSpec(bias.shape, const),
        ],
        out_specs=pl.BlockSpec((1, 1, TM), lambda i: (i, 0, 0)),
        compiler_params=pltpu.CompilerParams(
            dimension_semantics=("parallel",)),
        cost_estimate=pl.CostEstimate(
            flops=flops, transcendentals=0, bytes_accessed=bytes_accessed),
    )(x_p, slab_a, slab_b, slab_c, bias)

    # (G, 1, TM) lane-dense rows -> (B, 1) column.
    return out.reshape(-1, 1)[:B]


def reference_forward(x, params):
    """Pure-JAX reference with the same bf16-weight / f32-accumulate recipe."""
    h = x.astype(jnp.float32)
    for i, (w, b) in enumerate(params):
        h = jnp.dot(h.astype(jnp.bfloat16), w.astype(jnp.bfloat16),
                    preferred_element_type=jnp.float32) + b
        if i < len(params) - 1:
            h = jnp.maximum(h, 0.0)
    return h


if __name__ == "__main__":
    key = jax.random.PRNGKey(0)
    kx, kp = jax.random.split(key)

    params = init_params(kp)
    packed = pack_params(params)

    # Small batch: single grid step.
    B = 8
    x = jax.random.normal(kx, (B, 8), jnp.float32)
    out = jax.block_until_ready(mlp_forward(x, packed))
    ref = reference_forward(x, params)
    assert out.shape == (B, 1)
    assert jnp.allclose(out, ref, atol=1e-2, rtol=1e-2), (
        float(jnp.max(jnp.abs(out - ref))))

    # Larger batch: exercises the gridded path (TM=512, 2 parallel steps).
    B2 = 768
    x2 = jax.random.normal(jax.random.PRNGKey(1), (B2, 8), jnp.float32)
    out2 = jax.block_until_ready(mlp_forward(x2, packed))
    ref2 = reference_forward(x2, params)
    assert out2.shape == (B2, 1)
    assert jnp.allclose(out2, ref2, atol=1e-2, rtol=1e-2), (
        float(jnp.max(jnp.abs(out2 - ref2))))

    print("KERNEL_OK")
</pallas_src>

<mosaic_0001>
module attributes {stable_mosaic.version = 11 : i64} {
  func.func @mlp_kernel(%arg0: i32, %arg1: memref<16x16xbf16, #tpu.memory_space<vmem>>, %arg2: memref<656x256xbf16, #tpu.memory_space<vmem>>, %arg3: memref<256x640xbf16, #tpu.memory_space<vmem>>, %arg4: memref<272x128xbf16, #tpu.memory_space<vmem>>, %arg5: memref<8x640xf32, #tpu.memory_space<vmem>>, %arg6: memref<1x1x16xf32, #tpu.memory_space<vmem>>) attributes {dimension_semantics = [#tpu.dimension_semantics<parallel>], iteration_bounds = array<i64: 1>, scalar_prefetch = 0 : i64, scratch_operands = 0 : i64, tpu.core_type = #tpu.core_type<tc>, window_params = [{transform_indices = @transform_0, window_bounds = array<i64: 16, 16>}, {pipeline_mode = #tpu.pipeline_mode<synchronous>, transform_indices = @transform_1, window_bounds = array<i64: 656, 256>}, {pipeline_mode = #tpu.pipeline_mode<synchronous>, transform_indices = @transform_2, window_bounds = array<i64: 256, 640>}, {pipeline_mode = #tpu.pipeline_mode<synchronous>, transform_indices = @transform_3, window_bounds = array<i64: 272, 128>}, {pipeline_mode = #tpu.pipeline_mode<synchronous>, transform_indices = @transform_4, window_bounds = array<i64: 8, 640>}, {transform_indices = @transform_5, window_bounds = array<i64: 1, 1, 16>}]} {
    %c0 = arith.constant 0 : index
    %c0_0 = arith.constant 0 : index
    %0 = vector.load %arg1[%c0, %c0_0] : memref<16x16xbf16, #tpu.memory_space<vmem>>, vector<16x16xbf16>
    %c0_1 = arith.constant 0 : index
    %c0_2 = arith.constant 0 : index
    %1 = vector.load %arg2[%c0_1, %c0_2] : memref<656x256xbf16, #tpu.memory_space<vmem>>, vector<16x256xbf16>
    %cst = arith.constant dense<0.000000e+00> : vector<16x256xf32>
    %2 = tpu.matmul %0, %1, %cst {dimension_numbers = #tpu.dot_dimension_numbers<[1], [0], [0], [1], [0, 0, 1, 1], [], []>} : vector<16x16xbf16>, vector<16x256xbf16>, vector<16x256xf32> -> vector<16x256xf32>
    %c0_3 = arith.constant 0 : index
    %c0_4 = arith.constant 0 : index
    %3 = vector.load %arg5[%c0_3, %c0_4] : memref<8x640xf32, #tpu.memory_space<vmem>>, vector<1x256xf32>
    %4 = vector.broadcast %3 : vector<1x256xf32> to vector<16x256xf32>
    %5 = arith.addf %2, %4 : vector<16x256xf32>
    %cst_5 = arith.constant 0.000000e+00 : f32
    %6 = vector.broadcast %cst_5 : f32 to vector<16x256xf32>
    %7 = arith.maximumf %5, %6 : vector<16x256xf32>
    %8 = arith.truncf %7 : vector<16x256xf32> to vector<16x256xbf16>
    %c0_6 = arith.constant 0 : index
    %c0_7 = arith.constant 0 : index
    %9 = vector.load %arg3[%c0_6, %c0_7] : memref<256x640xbf16, #tpu.memory_space<vmem>>, vector<256x640xbf16>
    %cst_8 = arith.constant dense<0.000000e+00> : vector<16x640xf32>
    %10 = tpu.matmul %8, %9, %cst_8 {dimension_numbers = #tpu.dot_dimension_numbers<[1], [0], [0], [1], [0, 0, 1, 1], [], []>} : vector<16x256xbf16>, vector<256x640xbf16>, vector<16x640xf32> -> vector<16x640xf32>
    %c1 = arith.constant 1 : index
    %c0_9 = arith.constant 0 : index
    %11 = vector.load %arg5[%c1, %c0_9] : memref<8x640xf32, #tpu.memory_space<vmem>>, vector<1x640xf32>
    %12 = vector.broadcast %11 : vector<1x640xf32> to vector<16x640xf32>
    %13 = arith.addf %10, %12 : vector<16x640xf32>
    %cst_10 = arith.constant 0.000000e+00 : f32
    %14 = vector.broadcast %cst_10 : f32 to vector<16x640xf32>
    %15 = arith.maximumf %13, %14 : vector<16x640xf32>
    %16 = arith.truncf %15 : vector<16x640xf32> to vector<16x640xbf16>
    %c16 = arith.constant 16 : index
    %c0_11 = arith.constant 0 : index
    %17 = vector.load %arg2[%c16, %c0_11] : memref<656x256xbf16, #tpu.memory_space<vmem>>, vector<640x256xbf16>
    %cst_12 = arith.constant dense<0.000000e+00> : vector<16x256xf32>
    %18 = tpu.matmul %16, %17, %cst_12 {dimension_numbers = #tpu.dot_dimension_numbers<[1], [0], [0], [1], [0, 0, 1, 1], [], []>} : vector<16x640xbf16>, vector<640x256xbf16>, vector<16x256xf32> -> vector<16x256xf32>
    %c2 = arith.constant 2 : index
    %c0_13 = arith.constant 0 : index
    %19 = vector.load %arg5[%c2, %c0_13] : memref<8x640xf32, #tpu.memory_space<vmem>>, vector<1x256xf32>
    %20 = vector.broadcast %19 : vector<1x256xf32> to vector<16x256xf32>
    %21 = arith.addf %18, %20 : vector<16x256xf32>
    %cst_14 = arith.constant 0.000000e+00 : f32
    %22 = vector.broadcast %cst_14 : f32 to vector<16x256xf32>
    %23 = arith.maximumf %21, %22 : vector<16x256xf32>
    %24 = arith.truncf %23 : vector<16x256xf32> to vector<16x256xbf16>
    %c0_15 = arith.constant 0 : index
    %c0_16 = arith.constant 0 : index
    %25 = vector.load %arg4[%c0_15, %c0_16] : memref<272x128xbf16, #tpu.memory_space<vmem>>, vector<256x128xbf16>
    %cst_17 = arith.constant dense<0.000000e+00> : vector<16x128xf32>
    %26 = tpu.matmul %24, %25, %cst_17 {dimension_numbers = #tpu.dot_dimension_numbers<[1], [0], [0], [1], [0, 0, 1, 1], [], []>} : vector<16x256xbf16>, vector<256x128xbf16>, vector<16x128xf32> -> vector<16x128xf32>
    %c3 = arith.constant 3 : index
    %c0_18 = arith.constant 0 : index
    %27 = vector.load %arg5[%c3, %c0_18] : memref<8x640xf32, #tpu.memory_space<vmem>>, vector<1x128xf32>
    %28 = vector.broadcast %27 : vector<1x128xf32> to vector<16x128xf32>
    %29 = arith.addf %26, %28 : vector<16x128xf32>
    %cst_19 = arith.constant 0.000000e+00 : f32
    %30 = vector.broadcast %cst_19 : f32 to vector<16x128xf32>
    %31 = arith.maximumf %29, %30 : vector<16x128xf32>
    %32 = tpu.transpose %31, [1, 0] : vector<16x128xf32> -> vector<128x16xf32>
    %33 = arith.truncf %32 : vector<128x16xf32> to vector<128x16xbf16>
    %c256 = arith.constant 256 : index
    %c0_20 = arith.constant 0 : index
    %34 = vector.load %arg4[%c256, %c0_20] : memref<272x128xbf16, #tpu.memory_space<vmem>>, vector<16x128xbf16>
    %cst_21 = arith.constant dense<0.000000e+00> : vector<16x16xf32>
    %35 = tpu.matmul %34, %33, %cst_21 {dimension_numbers = #tpu.dot_dimension_numbers<[1], [0], [0], [1], [0, 0, 1, 1], [], []>} : vector<16x128xbf16>, vector<128x16xbf16>, vector<16x16xf32> -> vector<16x16xf32>
    %36 = vector.extract_strided_slice %35 {offsets = [0, 0], sizes = [1, 16], strides = [1, 1]} : vector<16x16xf32> to vector<1x16xf32>
    %c4 = arith.constant 4 : index
    %c0_22 = arith.constant 0 : index
    %37 = vector.load %arg5[%c4, %c0_22] : memref<8x640xf32, #tpu.memory_space<vmem>>, vector<1x1xf32>
    %38 = vector.broadcast %37 : vector<1x1xf32> to vector<1x16xf32>
    %39 = arith.addf %36, %38 : vector<1x16xf32>
    %40 = vector.shape_cast %39 : vector<1x16xf32> to vector<1x1x16xf32>
    %c0_23 = arith.constant 0 : index
    %c0_24 = arith.constant 0 : index
    %c0_25 = arith.constant 0 : index
    %41 = vector.load %arg6[%c0_23, %c0_24, %c0_25] : memref<1x1x16xf32, #tpu.memory_space<vmem>>, vector<1x1x16xf32>
    tpu.vector_store %arg6[%c0_23, %c0_24, %c0_25], %40 {strides = array<i32>} : memref<1x1x16xf32, #tpu.memory_space<vmem>>, vector<1x1x16xf32>,
    return
  }
  func.func @transform_0(%arg0: i32) -> (i32, i32) {
    %c0_i32 = arith.constant 0 : i32
    %c0_i32_0 = arith.constant 0 : i32
    return %arg0, %c0_i32 : i32, i32
  }
  func.func @transform_1(%arg0: i32) -> (i32, i32) {
    %c0_i32 = arith.constant 0 : i32
    %c0_i32_0 = arith.constant 0 : i32
    %c0_i32_1 = arith.constant 0 : i32
    return %c0_i32, %c0_i32_0 : i32, i32
  }
  func.func @transform_2(%arg0: i32) -> (i32, i32) {
    %c0_i32 = arith.constant 0 : i32
    %c0_i32_0 = arith.constant 0 : i32
    %c0_i32_1 = arith.constant 0 : i32
    return %c0_i32, %c0_i32_0 : i32, i32
  }
  func.func @transform_3(%arg0: i32) -> (i32, i32) {
    %c0_i32 = arith.constant 0 : i32
    %c0_i32_0 = arith.constant 0 : i32
    %c0_i32_1 = arith.constant 0 : i32
    return %c0_i32, %c0_i32_0 : i32, i32
  }
  func.func @transform_4(%arg0: i32) -> (i32, i32) {
    %c0_i32 = arith.constant 0 : i32
    %c0_i32_0 = arith.constant 0 : i32
    %c0_i32_1 = arith.constant 0 : i32
    return %c0_i32, %c0_i32_0 : i32, i32
  }
  func.func @transform_5(%arg0: i32) -> (i32, i32, i32) {
    %c0_i32 = arith.constant 0 : i32
    %c0_i32_0 = arith.constant 0 : i32
    %c0_i32_1 = arith.constant 0 : i32
    return %arg0, %c0_i32, %c0_i32_0 : i32, i32, i32
  }
}

</mosaic_0001>

<llo_original>
// kernel: tpu_custom_call.1
$region0: #{tpu_custom_call.1}
  #allocation0 [shape = 'u32[]', space=smem, size = 0x4, offset = 0x4, fixed_abs, tag = 'smem constant byte address 0x4 - core index']
  #allocation1 [shape = 'u32[72,128]{1,0:T(1,128)}', space=vmem, size = 0x9000, scoped, tag = 'internal scratch']
  %s0 = inlined_call_operand.hbm [shape: bf16[16,16], index: 0, kind: input, shape index: {}]
  %s1 = inlined_call_operand.hbm [shape: bf16[656,256], index: 1, kind: input, shape index: {}]
  %s2 = inlined_call_operand.hbm [shape: bf16[256,640], index: 2, kind: input, shape index: {}]
  %s3 = inlined_call_operand.hbm [shape: bf16[272,128], index: 3, kind: input, shape index: {}]
  %s4 = inlined_call_operand.hbm [shape: f32[8,640], index: 4, kind: input, shape index: {}]
  %s5 = inlined_call_operand.hbm [shape: f32[1,1,16], index: 5, kind: output, shape index: {}]
  %s6 = sld [smem:[#allocation0]]
  $region50: #{tpu_custom_call.1} parent=0
    _
  %s8 = ssub.s32 1, %s6
  %s9 = scalar_select 0, %s8, %s6
  $region1: #{tpu_custom_call.1} parent=0
    #allocation2 [shape = 'u8[4096]{0}', space=vmem, size = 0x1000, scoped, tag = 'input window, operand 0, single buffered']
    #allocation3 [shape = 's32[1]{0}', space=sflag, size = 0x4, scoped, tag = 'scoped memory for tpu_custom_call.1']
    #allocation4 [shape = 's32[1]{0}', space=sflag, size = 0x4, scoped, tag = 'scoped memory for tpu_custom_call.1']
    #allocation5 [shape = 'u8[335872]{0}', space=vmem, size = 0x52000, scoped, tag = 'input window, operand 1, single buffered']
    #allocation6 [shape = 's32[1]{0}', space=sflag, size = 0x4, scoped, tag = 'scoped memory for tpu_custom_call.1']
    #allocation7 [shape = 'u8[327680]{0}', space=vmem, size = 0x50000, scoped, tag = 'input window, operand 2, single buffered']
    #allocation8 [shape = 'u8[69632]{0}', space=vmem, size = 0x11000, scoped, tag = 'input window, operand 3, single buffered']
    #allocation9 [shape = 's32[1]{0}', space=sflag, size = 0x4, scoped, tag = 'scoped memory for tpu_custom_call.1']
    #allocation10 [shape = 'u8[20480]{0}', space=vmem, size = 0x5000, scoped, tag = 'input window, operand 4, single buffered']
    #allocation11 [shape = 'u8[512]{0}', space=vmem, size = 0x400, scoped, tag = 'output window, operand 0, single buffered']
    %10 = vsyncpa [#allocation3], 0
    %11 = vsyncpa [#allocation6], 0
    %12 = vsyncpa [#allocation9], 0
    %13 = vsyncpa [#allocation4], 0
    // Predicated region
    $region2: #{tpu_custom_call.1} parent=1 // pred_check
      _
    $region3: #{tpu_custom_call.1} parent=1 // pred_check_branch
      %15 = sbr.rel (0) target = $region5
    $region4: #{tpu_custom_call.1} parent=1 // pred_region
      %17 = vsyncadd [#allocation3], 0
      %s18 = sshll.u32 %s0, 4
      %s19 = int_to_ptr.hbm [resolvable:$true] %s18
      %s20 = sshll.u32 [#allocation2], 4
      %s21 = int_to_ptr.vmem [resolvable:$true] %s20
      %26 = dma.hbm_to_vmem [thread:$0]  %s19, 128, %s21, [#allocation3], 64, 64, 4
    $region5: #{tpu_custom_call.1} parent=1 // pred_fallthru
      _
    // Predicated region
    $region6: #{tpu_custom_call.1} parent=1 // pred_check
      _
    $region7: #{tpu_custom_call.1} parent=1 // pred_check_branch
      %28 = sbr.rel (0) target = $region9
    $region8: #{tpu_custom_call.1} parent=1 // pred_region
      %30 = vsyncadd [#allocation6], 0
      %s31 = sshll.u32 %s1, 4
      %s32 = int_to_ptr.hbm [resolvable:$true] %s31
      %s33 = sshll.u32 [#allocation5], 4
      %s34 = int_to_ptr.vmem [resolvable:$true] %s33
      %39 = dma.hbm_to_vmem [thread:$0]  %s32, 10496, %s34, [#allocation6], 128, 128, 8
    $region9: #{tpu_custom_call.1} parent=1 // pred_fallthru
      _
    // Predicated region
    $region10: #{tpu_custom_call.1} parent=1 // pred_check
      _
    $region11: #{tpu_custom_call.1} parent=1 // pred_check_branch
      %41 = sbr.rel (0) target = $region13
    $region12: #{tpu_custom_call.1} parent=1 // pred_region
      %43 = vsyncadd [#allocation6], 0
      %s44 = sshll.u32 %s2, 4
      %s45 = int_to_ptr.hbm [resolvable:$true] %s44
      %s46 = sshll.u32 [#allocation7], 4
      %s47 = int_to_ptr.vmem [resolvable:$true] %s46
      %52 = dma.hbm_to_vmem [thread:$0]  %s45, 10240, %s47, [#allocation6], 320, 320, 20
    $region13: #{tpu_custom_call.1} parent=1 // pred_fallthru
      _
    // Predicated region
    $region14: #{tpu_custom_call.1} parent=1 // pred_check
      _
    $region15: #{tpu_custom_call.1} parent=1 // pred_check_branch
      %54 = sbr.rel (0) target = $region17
    $region16: #{tpu_custom_call.1} parent=1 // pred_region
      %56 = vsyncadd [#allocation9], 0
      %s57 = sshll.u32 %s3, 4
      %s58 = int_to_ptr.hbm [resolvable:$true] %s57
      %s59 = sshll.u32 [#allocation8], 4
      %s60 = int_to_ptr.vmem [resolvable:$true] %s59
      %65 = dma.hbm_to_vmem [thread:$0]  %s58, 2176, %s60, [#allocation9], 64, 64, 4
    $region17: #{tpu_custom_call.1} parent=1 // pred_fallthru
      _
    // Predicated region
    $region18: #{tpu_custom_call.1} parent=1 // pred_check
      _
    $region19: #{tpu_custom_call.1} parent=1 // pred_check_branch
      %67 = sbr.rel (0) target = $region21
    $region20: #{tpu_custom_call.1} parent=1 // pred_region
      %69 = vsyncadd [#allocation9], 0
      %s71 = sshll.u32 %s4, 4
      %s72 = int_to_ptr.hbm [resolvable:$true] %s71
      %s73 = sshll.u32 [#allocation10], 4
      %s74 = int_to_ptr.vmem [resolvable:$true] %s73
      %76 = dma.hbm_to_vmem [thread:$0]  %s72, 640, %s74, [#allocation9]
    $region21: #{tpu_custom_call.1} parent=1 // pred_fallthru
      _
    // Predicated region
    $region22: #{tpu_custom_call.1} parent=1 // pred_check
      _
    $region23: #{tpu_custom_call.1} parent=1 // pred_check_branch
      %78 = sbr.rel (0) target = $region25
    $region24: #{tpu_custom_call.1} parent=1 // pred_region
      %80 = dma.done [#allocation3], 128
    $region25: #{tpu_custom_call.1} parent=1 // pred_fallthru
      _
    // Predicated region
    $region26: #{tpu_custom_call.1} parent=1 // pred_check
      _
    $region27: #{tpu_custom_call.1} parent=1 // pred_check_branch
      %82 = sbr.rel (0) target = $region29
    $region28: #{tpu_custom_call.1} parent=1 // pred_region
      %84 = dma.done [#allocation6], 10496
    $region29: #{tpu_custom_call.1} parent=1 // pred_fallthru
      _
    // Predicated region
    $region30: #{tpu_custom_call.1} parent=1 // pred_check
      _
    $region31: #{tpu_custom_call.1} parent=1 // pred_check_branch
      %86 = sbr.rel (0) target = $region33
    $region32: #{tpu_custom_call.1} parent=1 // pred_region
      %88 = dma.done [#allocation6], 10240
    $region33: #{tpu_custom_call.1} parent=1 // pred_fallthru
      _
    // Predicated region
    $region34: #{tpu_custom_call.1} parent=1 // pred_check
      _
    $region35: #{tpu_custom_call.1} parent=1 // pred_check_branch
      %90 = sbr.rel (0) target = $region37
    $region36: #{tpu_custom_call.1} parent=1 // pred_region
      %92 = dma.done [#allocation9], 2176
    $region37: #{tpu_custom_call.1} parent=1 // pred_fallthru
      _
    // Predicated region
    $region38: #{tpu_custom_call.1} parent=1 // pred_check
      _
    $region39: #{tpu_custom_call.1} parent=1 // pred_check_branch
      %94 = sbr.rel (0) target = $region41
    $region40: #{tpu_custom_call.1} parent=1 // pred_region
      %96 = dma.done [#allocation9], 640
    $region41: #{tpu_custom_call.1} parent=1 // pred_fallthru
      _
    %v98 = vld [vmem:[#allocation2] sm:$0xf]
    %v99 = vld [vmem:[#allocation2 + $0x4] sm:$0xf]
    %v100 = vld [vmem:[#allocation5] sm:$0xff]
    %v101 = vld [vmem:[#allocation5 + $0x8] sm:$0xff]
    %v102 = vld [vmem:[#allocation10] ss:$8 sm:$0x3]
    %v104 = vperm.slane %v102, 0
    %v105 = vperm.slane %v102, 1
    %v110 = vunpack.c.l.b16 %v98
    %v111 = vunpack.c.l.b16 %v99
    %v112 = vpack.c.b16 %v111, %v110
    %v115 = vunpack.c.l.b16 %v100
    %v116 = vunpack.c.h.b16 %v100
    %v117 = vunpack.c.l.b16 %v101
    %v118 = vunpack.c.h.b16 %v101
    %v119 = vpack.c.b16 %v117, %v115
    %v120 = vpack.c.b16 %v118, %v116
    %vm123 = vcmask 130048
    %v125 = vsel %vm123, %v112, 0
    %127 = vmatpush.bf16.msra.mxu0 0
    %128 = vmatpush.bf16.msra.mxu0 0
    %129 = vmatpush.bf16.msra.mxu0 0
    %130 = vmatpush.bf16.msra.mxu0 0
    %131 = vmatpush.bf16.msra.mxu0 0
    %132 = vmatpush.bf16.msra.mxu0 0
    %133 = vmatpush.bf16.msra.mxu0 0
    %134 = vmatpush.bf16.msra.mxu0 %v119
    %135 = vmatmul.bf16.gmra.mxu0 %v125
    %v136 = vpop.f32.mrf.mxu0
    %v137 = vadd.f32 %v104, %v136
    %v138 = vpop.f32.mrf.mxu0
    %v139 = vadd.f32 %v104, %v138
    %140 = vdwg.mxu0
    %141 = vmatpush.bf16.msra.mxu0 0
    %142 = vmatpush.bf16.msra.mxu0 0
    %143 = vmatpush.bf16.msra.mxu0 0
    %144 = vmatpush.bf16.msra.mxu0 0
    %145 = vmatpush.bf16.msra.mxu0 0
    %146 = vmatpush.bf16.msra.mxu0 0
    %147 = vmatpush.bf16.msra.mxu0 0
    %148 = vmatpush.bf16.msra.mxu0 %v120
    %149 = vmatmul.bf16.gmra.mxu0 %v125
    %v150 = vpop.f32.mrf.mxu0
    %v151 = vadd.f32 %v105, %v150
    %v152 = vpop.f32.mrf.mxu0
    %v153 = vadd.f32 %v105, %v152
    %154 = vdwg.mxu0
    %v155 = vmax.f32 %v137, 0.0
    %v156 = vmax.f32 %v151, 0.0
    %v157 = vmax.f32 %v139, 0.0
    %v158 = vmax.f32 %v153, 0.0
    %v159 = vpack.c.bf16 %v157, %v155
    %v160 = vpack.c.bf16 %v158, %v156
    %v161 = vld [vmem:[#allocation7] sm:$0xff]
    %v162 = vld [vmem:[#allocation7 + $0x8] sm:$0xff]
    %v163 = vld [vmem:[#allocation7 + $0x10] sm:$0xf]
    %v164 = vld [vmem:[#allocation7 + $0x14] sm:$0xff]
    %v165 = vld [vmem:[#allocation7 + $0x1c] sm:$0xff]
    %v166 = vld [vmem:[#allocation7 + $0x24] sm:$0xf]
    %v167 = vld [vmem:[#allocation7 + $0x28] sm:$0xff]
    %v168 = vld [vmem:[#allocation7 + $0x30] sm:$0xff]
    %v169 = vld [vmem:[#allocation7 + $0x38] sm:$0xf]
    %v170 = vld [vmem:[#allocation7 + $0x3c] sm:$0xff]
    %v171 = vld [vmem:[#allocation7 + $0x44] sm:$0xff]
    %v172 = vld [vmem:[#allocation7 + $0x4c] sm:$0xf]
    %v173 = vld [vmem:[#allocation7 + $0x50] sm:$0xff]
    %v174 = vld [vmem:[#allocation7 + $0x58] sm:$0xff]
    %v175 = vld [vmem:[#allocation7 + $0x60] sm:$0xf]
    %v176 = vld [vmem:[#allocation7 + $0x64] sm:$0xff]
    %v177 = vld [vmem:[#allocation7 + $0x6c] sm:$0xff]
    %v178 = vld [vmem:[#allocation7 + $0x74] sm:$0xf]
    %v179 = vld [vmem:[#allocation7 + $0x78] sm:$0xff]
    %v180 = vld [vmem:[#allocation7 + $0x80] sm:$0xff]
    %v181 = vld [vmem:[#allocation7 + $0x88] sm:$0xf]
    %v182 = vld [vmem:[#allocation7 + $0x8c] sm:$0xff]
    %v183 = vld [vmem:[#allocation7 + $0x94] sm:$0xff]
    %v184 = vld [vmem:[#allocation7 + $0x9c] sm:$0xf]
    %v185 = vld [vmem:[#allocation7 + $0xa0] sm:$0xff]
    %v186 = vld [vmem:[#allocation7 + $0xa8] sm:$0xff]
    %v187 = vld [vmem:[#allocation7 + $0xb0] sm:$0xf]
    %v188 = vld [vmem:[#allocation7 + $0xb4] sm:$0xff]
    %v189 = vld [vmem:[#allocation7 + $0xbc] sm:$0xff]
    %v190 = vld [vmem:[#allocation7 + $0xc4] sm:$0xf]
    %v191 = vld [vmem:[#allocation7 + $0xc8] sm:$0xff]
    %v192 = vld [vmem:[#allocation7 + $0xd0] sm:$0xff]
    %v193 = vld [vmem:[#allocation7 + $0xd8] sm:$0xf]
    %v194 = vld [vmem:[#allocation7 + $0xdc] sm:$0xff]
    %v195 = vld [vmem:[#allocation7 + $0xe4] sm:$0xff]
    %v196 = vld [vmem:[#allocation7 + $0xec] sm:$0xf]
    %v197 = vld [vmem:[#allocation7 + $0xf0] sm:$0xff]
    %v198 = vld [vmem:[#allocation7 + $0xf8] sm:$0xff]
    %v199 = vld [vmem:[#allocation7 + $0x100] sm:$0xf]
    %v200 = vld [vmem:[#allocation7 + $0x104] sm:$0xff]
    %v201 = vld [vmem:[#allocation7 + $0x10c] sm:$0xff]
    %v202 = vld [vmem:[#allocation7 + $0x114] sm:$0xf]
    %v203 = vld [vmem:[#allocation7 + $0x118] sm:$0xff]
    %v204 = vld [vmem:[#allocation7 + $0x120] sm:$0xff]
    %v205 = vld [vmem:[#allocation7 + $0x128] sm:$0xf]
    %v206 = vld [vmem:[#allocation7 + $0x12c] sm:$0xff]
    %v207 = vld [vmem:[#allocation7 + $0x134] sm:$0xff]
    %v208 = vld [vmem:[#allocation7 + $0x13c] sm:$0xf]
    %v209 = vld [vmem:[#allocation7 + $0x140] sm:$0xff]
    %v210 = vld [vmem:[#allocation7 + $0x148] sm:$0xff]
    %v211 = vld [vmem:[#allocation7 + $0x150] sm:$0xf]
    %v212 = vld [vmem:[#allocation7 + $0x154] sm:$0xff]
    %v213 = vld [vmem:[#allocation7 + $0x15c] sm:$0xff]
    %v214 = vld [vmem:[#allocation7 + $0x164] sm:$0xf]
    %v215 = vld [vmem:[#allocation7 + $0x168] sm:$0xff]
    %v216 = vld [vmem:[#allocation7 + $0x170] sm:$0xff]
    %v217 = vld [vmem:[#allocation7 + $0x178] sm:$0xf]
    %v218 = vld [vmem:[#allocation7 + $0x17c] sm:$0xff]
    %v219 = vld [vmem:[#allocation7 + $0x184] sm:$0xff]
    %v220 = vld [vmem:[#allocation7 + $0x18c] sm:$0xf]
    %v221 = vld [vmem:[#allocation7 + $0x190] sm:$0xff]
    %v222 = vld [vmem:[#allocation7 + $0x198] sm:$0xff]
    %v223 = vld [vmem:[#allocation7 + $0x1a0] sm:$0xf]
    %v224 = vld [vmem:[#allocation7 + $0x1a4] sm:$0xff]
    %v225 = vld [vmem:[#allocation7 + $0x1ac] sm:$0xff]
    %v226 = vld [vmem:[#allocation7 + $0x1b4] sm:$0xf]
    %v227 = vld [vmem:[#allocation7 + $0x1b8] sm:$0xff]
    %v228 = vld [vmem:[#allocation7 + $0x1c0] sm:$0xff]
    %v229 = vld [vmem:[#allocation7 + $0x1c8] sm:$0xf]
    %v230 = vld [vmem:[#allocation7 + $0x1cc] sm:$0xff]
    %v231 = vld [vmem:[#allocation7 + $0x1d4] sm:$0xff]
    %v232 = vld [vmem:[#allocation7 + $0x1dc] sm:$0xf]
    %v233 = vld [vmem:[#allocation7 + $0x1e0] sm:$0xff]
    %v234 = vld [vmem:[#allocation7 + $0x1e8] sm:$0xff]
    %v235 = vld [vmem:[#allocation7 + $0x1f0] sm:$0xf]
    %v236 = vld [vmem:[#allocation7 + $0x1f4] sm:$0xff]
    %v237 = vld [vmem:[#allocation7 + $0x1fc] sm:$0xff]
    %v238 = vld [vmem:[#allocation7 + $0x204] sm:$0xf]
    %v239 = vld [vmem:[#allocation7 + $0x208] sm:$0xff]
    %v240 = vld [vmem:[#allocation7 + $0x210] sm:$0xff]
    %v241 = vld [vmem:[#allocation7 + $0x218] sm:$0xf]
    %v242 = vld [vmem:[#allocation7 + $0x21c] sm:$0xff]
    %v243 = vld [vmem:[#allocation7 + $0x224] sm:$0xff]
    %v244 = vld [vmem:[#allocation7 + $0x22c] sm:$0xf]
    %v245 = vld [vmem:[#allocation7 + $0x230] sm:$0xff]
    %v246 = vld [vmem:[#allocation7 + $0x238] sm:$0xff]
    %v247 = vld [vmem:[#allocation7 + $0x240] sm:$0xf]
    %v248 = vld [vmem:[#allocation7 + $0x244] sm:$0xff]
    %v249 = vld [vmem:[#allocation7 + $0x24c] sm:$0xff]
    %v250 = vld [vmem:[#allocation7 + $0x254] sm:$0xf]
    %v251 = vld [vmem:[#allocation7 + $0x258] sm:$0xff]
    %v252 = vld [vmem:[#allocation7 + $0x260] sm:$0xff]
    %v253 = vld [vmem:[#allocation7 + $0x268] sm:$0xf]
    %v254 = vld [vmem:[#allocation7 + $0x26c] sm:$0xff]
    %v255 = vld [vmem:[#allocation7 + $0x274] sm:$0xff]
    %v256 = vld [vmem:[#allocation7 + $0x27c] sm:$0xf]
    %s257 = scalar_lea.vmem [#allocation10], 1
    %v258 = vld [vmem:[%s257] ss:$8 sm:$0xf]
    %v259 = vld [vmem:[%s257] ss:$8 sm:$0x10]
    %v260 = vor.u32 %v258, %v259
    %v262 = vperm.slane %v260, 0
    %v263 = vperm.slane %v260, 1
    %v264 = vperm.slane %v260, 2
    %v265 = vperm.slane %v260, 3
    %v266 = vperm.slane %v260, 4
    %v368 = vunpack.c.l.b16 %v161
    %v369 = vunpack.c.h.b16 %v161
    %v370 = vunpack.c.l.b16 %v162
    %v371 = vunpack.c.h.b16 %v162
    %v372 = vunpack.c.l.b16 %v163
    %v373 = vunpack.c.l.b16 %v164
    %v374 = vunpack.c.h.b16 %v164
    %v375 = vunpack.c.l.b16 %v165
    %v376 = vunpack.c.h.b16 %v165
    %v377 = vunpack.c.l.b16 %v166
    %v378 = vunpack.c.l.b16 %v167
    %v379 = vunpack.c.h.b16 %v167
    %v380 = vunpack.c.l.b16 %v168
    %v381 = vunpack.c.h.b16 %v168
    %v382 = vunpack.c.l.b16 %v169
    %v383 = vunpack.c.l.b16 %v170
    %v384 = vunpack.c.h.b16 %v170
    %v385 = vunpack.c.l.b16 %v171
    %v386 = vunpack.c.h.b16 %v171
    %v387 = vunpack.c.l.b16 %v172
    %v388 = vunpack.c.l.b16 %v173
    %v389 = vunpack.c.h.b16 %v173
    %v390 = vunpack.c.l.b16 %v174
    %v391 = vunpack.c.h.b16 %v174
    %v392 = vunpack.c.l.b16 %v175
    %v393 = vunpack.c.l.b16 %v176
    %v394 = vunpack.c.h.b16 %v176
    %v395 = vunpack.c.l.b16 %v177
    %v396 = vunpack.c.h.b16 %v177
    %v397 = vunpack.c.l.b16 %v178
    %v398 = vunpack.c.l.b16 %v179
    %v399 = vunpack.c.h.b16 %v179
    %v400 = vunpack.c.l.b16 %v180
    %v401 = vunpack.c.h.b16 %v180
    %v402 = vunpack.c.l.b16 %v181
    %v403 = vunpack.c.l.b16 %v182
    %v404 = vunpack.c.h.b16 %v182
    %v405 = vunpack.c.l.b16 %v183
    %v406 = vunpack.c.h.b16 %v183
    %v407 = vunpack.c.l.b16 %v184
    %v408 = vunpack.c.l.b16 %v185
    %v409 = vunpack.c.h.b16 %v185
    %v410 = vunpack.c.l.b16 %v186
    %v411 = vunpack.c.h.b16 %v186
    %v412 = vunpack.c.l.b16 %v187
    %v413 = vunpack.c.l.b16 %v188
    %v414 = vunpack.c.h.b16 %v188
    %v415 = vunpack.c.l.b16 %v189
    %v416 = vunpack.c.h.b16 %v189
    %v417 = vunpack.c.l.b16 %v190
    %v418 = vunpack.c.l.b16 %v191
    %v419 = vunpack.c.h.b16 %v191
    %v420 = vunpack.c.l.b16 %v192
    %v421 = vunpack.c.h.b16 %v192
    %v422 = vunpack.c.l.b16 %v193
    %v423 = vunpack.c.l.b16 %v194
    %v424 = vunpack.c.h.b16 %v194
    %v425 = vunpack.c.l.b16 %v195
    %v426 = vunpack.c.h.b16 %v195
    %v427 = vunpack.c.l.b16 %v196
    %v428 = vunpack.c.l.b16 %v197
    %v429 = vunpack.c.h.b16 %v197
    %v430 = vunpack.c.l.b16 %v198
    %v431 = vunpack.c.h.b16 %v198
    %v432 = vunpack.c.l.b16 %v199
    %v433 = vunpack.c.l.b16 %v200
    %v434 = vunpack.c.h.b16 %v200
    %v435 = vunpack.c.l.b16 %v201
    %v436 = vunpack.c.h.b16 %v201
    %v437 = vunpack.c.l.b16 %v202
    %v438 = vunpack.c.l.b16 %v203
    %v439 = vunpack.c.h.b16 %v203
    %v440 = vunpack.c.l.b16 %v204
    %v441 = vunpack.c.h.b16 %v204
    %v442 = vunpack.c.l.b16 %v205
    %v443 = vunpack.c.l.b16 %v206
    %v444 = vunpack.c.h.b16 %v206
    %v445 = vunpack.c.l.b16 %v207
    %v446 = vunpack.c.h.b16 %v207
    %v447 = vunpack.c.l.b16 %v208
    %v448 = vunpack.c.l.b16 %v209
    %v449 = vunpack.c.h.b16 %v209
    %v450 = vunpack.c.l.b16 %v210
    %v451 = vunpack.c.h.b16 %v210
    %v452 = vunpack.c.l.b16 %v211
    %v453 = vunpack.c.l.b16 %v212
    %v454 = vunpack.c.h.b16 %v212
    %v455 = vunpack.c.l.b16 %v213
    %v456 = vunpack.c.h.b16 %v213
    %v457 = vunpack.c.l.b16 %v214
    %v458 = vunpack.c.l.b16 %v215
    %v459 = vunpack.c.h.b16 %v215
    %v460 = vunpack.c.l.b16 %v216
    %v461 = vunpack.c.h.b16 %v216
    %v462 = vunpack.c.l.b16 %v217
    %v463 = vunpack.c.l.b16 %v218
    %v464 = vunpack.c.h.b16 %v218
    %v465 = vunpack.c.l.b16 %v219
    %v466 = vunpack.c.h.b16 %v219
    %v467 = vunpack.c.l.b16 %v220
    %v468 = vunpack.c.l.b16 %v221
    %v469 = vunpack.c.h.b16 %v221
    %v470 = vunpack.c.l.b16 %v222
    %v471 = vunpack.c.h.b16 %v222
    %v472 = vunpack.c.l.b16 %v223
    %v473 = vunpack.c.l.b16 %v224
    %v474 = vunpack.c.h.b16 %v224
    %v475 = vunpack.c.l.b16 %v225
    %v476 = vunpack.c.h.b16 %v225
    %v477 = vunpack.c.l.b16 %v226
    %v478 = vunpack.c.l.b16 %v227
    %v479 = vunpack.c.h.b16 %v227
    %v480 = vunpack.c.l.b16 %v228
    %v481 = vunpack.c.h.b16 %v228
    %v482 = vunpack.c.l.b16 %v229
    %v483 = vunpack.c.l.b16 %v230
    %v484 = vunpack.c.h.b16 %v230
    %v485 = vunpack.c.l.b16 %v231
    %v486 = vunpack.c.h.b16 %v231
    %v487 = vunpack.c.l.b16 %v232
    %v488 = vunpack.c.l.b16 %v233
    %v489 = vunpack.c.h.b16 %v233
    %v490 = vunpack.c.l.b16 %v234
    %v491 = vunpack.c.h.b16 %v234
    %v492 = vunpack.c.l.b16 %v235
    %v493 = vunpack.c.l.b16 %v236
    %v494 = vunpack.c.h.b16 %v236
    %v495 = vunpack.c.l.b16 %v237
    %v496 = vunpack.c.h.b16 %v237
    %v497 = vunpack.c.l.b16 %v238
    %v498 = vunpack.c.l.b16 %v239
    %v499 = vunpack.c.h.b16 %v239
    %v500 = vunpack.c.l.b16 %v240
    %v501 = vunpack.c.h.b16 %v240
    %v502 = vunpack.c.l.b16 %v241
    %v503 = vunpack.c.l.b16 %v242
    %v504 = vunpack.c.h.b16 %v242
    %v505 = vunpack.c.l.b16 %v243
    %v506 = vunpack.c.h.b16 %v243
    %v507 = vunpack.c.l.b16 %v244
    %v508 = vunpack.c.l.b16 %v245
    %v509 = vunpack.c.h.b16 %v245
    %v510 = vunpack.c.l.b16 %v246
    %v511 = vunpack.c.h.b16 %v246
    %v512 = vunpack.c.l.b16 %v247
    %v513 = vunpack.c.l.b16 %v248
    %v514 = vunpack.c.h.b16 %v248
    %v515 = vunpack.c.l.b16 %v249
    %v516 = vunpack.c.h.b16 %v249
    %v517 = vunpack.c.l.b16 %v250
    %v518 = vunpack.c.l.b16 %v251
    %v519 = vunpack.c.h.b16 %v251
    %v520 = vunpack.c.l.b16 %v252
    %v521 = vunpack.c.h.b16 %v252
    %v522 = vunpack.c.l.b16 %v253
    %v523 = vunpack.c.l.b16 %v254
    %v524 = vunpack.c.h.b16 %v254
    %v525 = vunpack.c.l.b16 %v255
    %v526 = vunpack.c.h.b16 %v255
    %v527 = vunpack.c.l.b16 %v256
    %v528 = vpack.c.b16 %v373, %v368
    %v529 = vpack.c.b16 %v374, %v369
    %v530 = vpack.c.b16 %v375, %v370
    %v531 = vpack.c.b16 %v376, %v371
    %v532 = vpack.c.b16 %v377, %v372
    %v533 = vpack.c.b16 %v383, %v378
    %v534 = vpack.c.b16 %v384, %v379
    %v535 = vpack.c.b16 %v385, %v380
    %v536 = vpack.c.b16 %v386, %v381
    %v537 = vpack.c.b16 %v387, %v382
    %v538 = vpack.c.b16 %v393, %v388
    %v539 = vpack.c.b16 %v394, %v389
    %v540 = vpack.c.b16 %v395, %v390
    %v541 = vpack.c.b16 %v396, %v391
    %v542 = vpack.c.b16 %v397, %v392
    %v543 = vpack.c.b16 %v403, %v398
    %v544 = vpack.c.b16 %v404, %v399
    %v545 = vpack.c.b16 %v405, %v400
    %v546 = vpack.c.b16 %v406, %v401
    %v547 = vpack.c.b16 %v407, %v402
    %v548 = vpack.c.b16 %v413, %v408
    %v549 = vpack.c.b16 %v414, %v409
    %v550 = vpack.c.b16 %v415, %v410
    %v551 = vpack.c.b16 %v416, %v411
    %v552 = vpack.c.b16 %v417, %v412
    %v553 = vpack.c.b16 %v423, %v418
    %v554 = vpack.c.b16 %v424, %v419
    %v555 = vpack.c.b16 %v425, %v420
    %v556 = vpack.c.b16 %v426, %v421
    %v557 = vpack.c.b16 %v427, %v422
    %v558 = vpack.c.b16 %v433, %v428
    %v559 = vpack.c.b16 %v434, %v429
    %v560 = vpack.c.b16 %v435, %v430
    %v561 = vpack.c.b16 %v436, %v431
    %v562 = vpack.c.b16 %v437, %v432
    %v563 = vpack.c.b16 %v443, %v438
    %v564 = vpack.c.b16 %v444, %v439
    %v565 = vpack.c.b16 %v445, %v440
    %v566 = vpack.c.b16 %v446, %v441
    %v567 = vpack.c.b16 %v447, %v442
    %v568 = vpack.c.b16 %v453, %v448
    %v569 = vpack.c.b16 %v454, %v449
    %v570 = vpack.c.b16 %v455, %v450
    %v571 = vpack.c.b16 %v456, %v451
    %v572 = vpack.c.b16 %v457, %v452
    %v573 = vpack.c.b16 %v463, %v458
    %v574 = vpack.c.b16 %v464, %v459
    %v575 = vpack.c.b16 %v465, %v460
    %v576 = vpack.c.b16 %v466, %v461
    %v577 = vpack.c.b16 %v467, %v462
    %v578 = vpack.c.b16 %v473, %v468
    %v579 = vpack.c.b16 %v474, %v469
    %v580 = vpack.c.b16 %v475, %v470
    %v581 = vpack.c.b16 %v476, %v471
    %v582 = vpack.c.b16 %v477, %v472
    %v583 = vpack.c.b16 %v483, %v478
    %v584 = vpack.c.b16 %v484, %v479
    %v585 = vpack.c.b16 %v485, %v480
    %v586 = vpack.c.b16 %v486, %v481
    %v587 = vpack.c.b16 %v487, %v482
    %v588 = vpack.c.b16 %v493, %v488
    %v589 = vpack.c.b16 %v494, %v489
    %v590 = vpack.c.b16 %v495, %v490
    %v591 = vpack.c.b16 %v496, %v491
    %v592 = vpack.c.b16 %v497, %v492
    %v593 = vpack.c.b16 %v503, %v498
    %v594 = vpack.c.b16 %v504, %v499
    %v595 = vpack.c.b16 %v505, %v500
    %v596 = vpack.c.b16 %v506, %v501
    %v597 = vpack.c.b16 %v507, %v502
    %v598 = vpack.c.b16 %v513, %v508
    %v599 = vpack.c.b16 %v514, %v509
    %v600 = vpack.c.b16 %v515, %v510
    %v601 = vpack.c.b16 %v516, %v511
    %v602 = vpack.c.b16 %v517, %v512
    %v603 = vpack.c.b16 %v523, %v518
    %v604 = vpack.c.b16 %v524, %v519
    %v605 = vpack.c.b16 %v525, %v520
    %v606 = vpack.c.b16 %v526, %v521
    %v607 = vpack.c.b16 %v527, %v522
    %688 = vmatpush.bf16.msra.mxu0 %v563
    %689 = vmatpush.bf16.msra.mxu0 %v558
    %690 = vmatpush.bf16.msra.mxu0 %v553
    %691 = vmatpush.bf16.msra.mxu0 %v548
    %692 = vmatpush.bf16.msra.mxu0 %v543
    %693 = vmatpush.bf16.msra.mxu0 %v538
    %694 = vmatpush.bf16.msra.mxu0 %v533
    %695 = vmatpush.bf16.msra.mxu0 %v528
    %696 = vmatmul.bf16.gmra.mxu0 %v159
    %v697 = vpop.f32.mrf.mxu0
    %v698 = vadd.f32 %v262, %v697
    %v699 = vpop.f32.mrf.mxu0
    %v700 = vadd.f32 %v262, %v699
    %701 = vdwg.mxu0
    %702 = vmatpush.bf16.msra.mxu0 %v603
    %703 = vmatpush.bf16.msra.mxu0 %v598
    %704 = vmatpush.bf16.msra.mxu0 %v593
    %705 = vmatpush.bf16.msra.mxu0 %v588
    %706 = vmatpush.bf16.msra.mxu0 %v583
    %707 = vmatpush.bf16.msra.mxu0 %v578
    %708 = vmatpush.bf16.msra.mxu0 %v573
    %709 = vmatpush.bf16.msra.mxu0 %v568
    %710 = vmatmul.bf16.gmra.mxu0 %v160
    %v711 = vpop.f32.mrf.mxu0
    %v712 = vadd.f32 %v698, %v711
    %v713 = vpop.f32.mrf.mxu0
    %v714 = vadd.f32 %v700, %v713
    %715 = vdwg.mxu0
    %716 = vmatpush.bf16.msra.mxu0 %v564
    %717 = vmatpush.bf16.msra.mxu0 %v559
    %718 = vmatpush.bf16.msra.mxu0 %v554
    %719 = vmatpush.bf16.msra.mxu0 %v549
    %720 = vmatpush.bf16.msra.mxu0 %v544
    %721 = vmatpush.bf16.msra.mxu0 %v539
    %722 = vmatpush.bf16.msra.mxu0 %v534
    %723 = vmatpush.bf16.msra.mxu0 %v529
    %724 = vmatmul.bf16.gmra.mxu0 %v159
    %v725 = vpop.f32.mrf.mxu0
    %v726 = vadd.f32 %v263, %v725
    %v727 = vpop.f32.mrf.mxu0
    %v728 = vadd.f32 %v263, %v727
    %729 = vdwg.mxu0
    %730 = vmatpush.bf16.msra.mxu0 %v604
    %731 = vmatpush.bf16.msra.mxu0 %v599
    %732 = vmatpush.bf16.msra.mxu0 %v594
    %733 = vmatpush.bf16.msra.mxu0 %v589
    %734 = vmatpush.bf16.msra.mxu0 %v584
    %735 = vmatpush.bf16.msra.mxu0 %v579
    %736 = vmatpush.bf16.msra.mxu0 %v574
    %737 = vmatpush.bf16.msra.mxu0 %v569
    %738 = vmatmul.bf16.gmra.mxu0 %v160
    %v739 = vpop.f32.mrf.mxu0
    %v740 = vadd.f32 %v726, %v739
    %v741 = vpop.f32.mrf.mxu0
    %v742 = vadd.f32 %v728, %v741
    %743 = vdwg.mxu0
    %744 = vmatpush.bf16.msra.mxu0 %v565
    %745 = vmatpush.bf16.msra.mxu0 %v560
    %746 = vmatpush.bf16.msra.mxu0 %v555
    %747 = vmatpush.bf16.msra.mxu0 %v550
    %748 = vmatpush.bf16.msra.mxu0 %v545
    %749 = vmatpush.bf16.msra.mxu0 %v540
    %750 = vmatpush.bf16.msra.mxu0 %v535
    %751 = vmatpush.bf16.msra.mxu0 %v530
    %752 = vmatmul.bf16.gmra.mxu0 %v159
    %v753 = vpop.f32.mrf.mxu0
    %v754 = vadd.f32 %v264, %v753
    %v755 = vpop.f32.mrf.mxu0
    %v756 = vadd.f32 %v264, %v755
    %757 = vdwg.mxu0
    %758 = vmatpush.bf16.msra.mxu0 %v605
    %759 = vmatpush.bf16.msra.mxu0 %v600
    %760 = vmatpush.bf16.msra.mxu0 %v595
    %761 = vmatpush.bf16.msra.mxu0 %v590
    %762 = vmatpush.bf16.msra.mxu0 %v585
    %763 = vmatpush.bf16.msra.mxu0 %v580
    %764 = vmatpush.bf16.msra.mxu0 %v575
    %765 = vmatpush.bf16.msra.mxu0 %v570
    %766 = vmatmul.bf16.gmra.mxu0 %v160
    %v767 = vpop.f32.mrf.mxu0
    %v768 = vadd.f32 %v754, %v767
    %v769 = vpop.f32.mrf.mxu0
    %v770 = vadd.f32 %v756, %v769
    %771 = vdwg.mxu0
    %772 = vmatpush.bf16.msra.mxu0 %v566
    %773 = vmatpush.bf16.msra.mxu0 %v561
    %774 = vmatpush.bf16.msra.mxu0 %v556
    %775 = vmatpush.bf16.msra.mxu0 %v551
    %776 = vmatpush.bf16.msra.mxu0 %v546
    %777 = vmatpush.bf16.msra.mxu0 %v541
    %778 = vmatpush.bf16.msra.mxu0 %v536
    %779 = vmatpush.bf16.msra.mxu0 %v531
    %780 = vmatmul.bf16.gmra.mxu0 %v159
    %v781 = vpop.f32.mrf.mxu0
    %v782 = vadd.f32 %v265, %v781
    %v783 = vpop.f32.mrf.mxu0
    %v784 = vadd.f32 %v265, %v783
    %785 = vdwg.mxu0
    %786 = vmatpush.bf16.msra.mxu0 %v606
    %787 = vmatpush.bf16.msra.mxu0 %v601
    %788 = vmatpush.bf16.msra.mxu0 %v596
    %789 = vmatpush.bf16.msra.mxu0 %v591
    %790 = vmatpush.bf16.msra.mxu0 %v586
    %791 = vmatpush.bf16.msra.mxu0 %v581
    %792 = vmatpush.bf16.msra.mxu0 %v576
    %793 = vmatpush.bf16.msra.mxu0 %v571
    %794 = vmatmul.bf16.gmra.mxu0 %v160
    %v795 = vpop.f32.mrf.mxu0
    %v796 = vadd.f32 %v782, %v795
    %v797 = vpop.f32.mrf.mxu0
    %v798 = vadd.f32 %v784, %v797
    %799 = vdwg.mxu0
    %800 = vmatpush.bf16.msra.mxu0 %v567
    %801 = vmatpush.bf16.msra.mxu0 %v562
    %802 = vmatpush.bf16.msra.mxu0 %v557
    %803 = vmatpush.bf16.msra.mxu0 %v552
    %804 = vmatpush.bf16.msra.mxu0 %v547
    %805 = vmatpush.bf16.msra.mxu0 %v542
    %806 = vmatpush.bf16.msra.mxu0 %v537
    %807 = vmatpush.bf16.msra.mxu0 %v532
    %808 = vmatmul.bf16.gmra.mxu0 %v159
    %v809 = vpop.f32.mrf.mxu0
    %v810 = vadd.f32 %v266, %v809
    %v811 = vpop.f32.mrf.mxu0
    %v812 = vadd.f32 %v266, %v811
    %813 = vdwg.mxu0
    %814 = vmatpush.bf16.msra.mxu0 %v607
    %815 = vmatpush.bf16.msra.mxu0 %v602
    %816 = vmatpush.bf16.msra.mxu0 %v597
    %817 = vmatpush.bf16.msra.mxu0 %v592
    %818 = vmatpush.bf16.msra.mxu0 %v587
    %819 = vmatpush.bf16.msra.mxu0 %v582
    %820 = vmatpush.bf16.msra.mxu0 %v577
    %821 = vmatpush.bf16.msra.mxu0 %v572
    %822 = vmatmul.bf16.gmra.mxu0 %v160
    %v823 = vpop.f32.mrf.mxu0
    %v824 = vadd.f32 %v810, %v823
    %v825 = vpop.f32.mrf.mxu0
    %v826 = vadd.f32 %v812, %v825
    %827 = vdwg.mxu0
    %v828 = vmax.f32 %v712, 0.0
    %v829 = vmax.f32 %v740, 0.0
    %v830 = vmax.f32 %v768, 0.0
    %v831 = vmax.f32 %v796, 0.0
    %v832 = vmax.f32 %v824, 0.0
    %v833 = vmax.f32 %v714, 0.0
    %v834 = vmax.f32 %v742, 0.0
    %v835 = vmax.f32 %v770, 0.0
    %v836 = vmax.f32 %v798, 0.0
    %v837 = vmax.f32 %v826, 0.0
    %v838 = vpack.c.bf16 %v833, %v828
    %v839 = vpack.c.bf16 %v834, %v829
    %v840 = vpack.c.bf16 %v835, %v830
    %v841 = vpack.c.bf16 %v836, %v831
    %v842 = vpack.c.bf16 %v837, %v832
    %v843 = vld [vmem:[#allocation5 + $0x10] sm:$0xff]
    %v844 = vld [vmem:[#allocation5 + $0x18] sm:$0xff]
    %v845 = vld [vmem:[#allocation5 + $0x20] sm:$0xff]
    %v846 = vld [vmem:[#allocation5 + $0x28] sm:$0xff]
    %v847 = vld [vmem:[#allocation5 + $0x30] sm:$0xff]
    %v848 = vld [vmem:[#allocation5 + $0x38] sm:$0xff]
    %v849 = vld [vmem:[#allocation5 + $0x40] sm:$0xff]
    %v850 = vld [vmem:[#allocation5 + $0x48] sm:$0xff]
    %v851 = vld [vmem:[#allocation5 + $0x50] sm:$0xff]
    %v852 = vld [vmem:[#allocation5 + $0x58] sm:$0xff]
    %v853 = vld [vmem:[#allocation5 + $0x60] sm:$0xff]
    %v854 = vld [vmem:[#allocation5 + $0x68] sm:$0xff]
    %v855 = vld [vmem:[#allocation5 + $0x70] sm:$0xff]
    %v856 = vld [vmem:[#allocation5 + $0x78] sm:$0xff]
    %v857 = vld [vmem:[#allocation5 + $0x80] sm:$0xff]
    %v858 = vld [vmem:[#allocation5 + $0x88] sm:$0xff]
    %v859 = vld [vmem:[#allocation5 + $0x90] sm:$0xff]
    %v860 = vld [vmem:[#allocation5 + $0x98] sm:$0xff]
    %v861 = vld [vmem:[#allocation5 + $0xa0] sm:$0xff]
    %v862 = vld [vmem:[#allocation5 + $0xa8] sm:$0xff]
    %v863 = vld [vmem:[#allocation5 + $0xb0] sm:$0xff]
    %v864 = vld [vmem:[#allocation5 + $0xb8] sm:$0xff]
    %v865 = vld [vmem:[#allocation5 + $0xc0] sm:$0xff]
    %v866 = vld [vmem:[#allocation5 + $0xc8] sm:$0xff]
    %v867 = vld [vmem:[#allocation5 + $0xd0] sm:$0xff]
    %v868 = vld [vmem:[#allocation5 + $0xd8] sm:$0xff]
    %v869 = vld [vmem:[#allocation5 + $0xe0] sm:$0xff]
    %v870 = vld [vmem:[#allocation5 + $0xe8] sm:$0xff]
    %v871 = vld [vmem:[#allocation5 + $0xf0] sm:$0xff]
    %v872 = vld [vmem:[#allocation5 + $0xf8] sm:$0xff]
    %v873 = vld [vmem:[#allocation5 + $0x100] sm:$0xff]
    %v874 = vld [vmem:[#allocation5 + $0x108] sm:$0xff]
    %v875 = vld [vmem:[#allocation5 + $0x110] sm:$0xff]
    %v876 = vld [vmem:[#allocation5 + $0x118] sm:$0xff]
    %v877 = vld [vmem:[#allocation5 + $0x120] sm:$0xff]
    %v878 = vld [vmem:[#allocation5 + $0x128] sm:$0xff]
    %v879 = vld [vmem:[#allocation5 + $0x130] sm:$0xff]
    %v880 = vld [vmem:[#allocation5 + $0x138] sm:$0xff]
    %v881 = vld [vmem:[#allocation5 + $0x140] sm:$0xff]
    %v882 = vld [vmem:[#allocation5 + $0x148] sm:$0xff]
    %v883 = vld [vmem:[#allocation5 + $0x150] sm:$0xff]
    %v884 = vld [vmem:[#allocation5 + $0x158] sm:$0xff]
    %v885 = vld [vmem:[#allocation5 + $0x160] sm:$0xff]
    %v886 = vld [vmem:[#allocation5 + $0x168] sm:$0xff]
    %v887 = vld [vmem:[#allocation5 + $0x170] sm:$0xff]
    %v888 = vld [vmem:[#allocation5 + $0x178] sm:$0xff]
    %v889 = vld [vmem:[#allocation5 + $0x180] sm:$0xff]
    %v890 = vld [vmem:[#allocation5 + $0x188] sm:$0xff]
    %v891 = vld [vmem:[#allocation5 + $0x190] sm:$0xff]
    %v892 = vld [vmem:[#allocation5 + $0x198] sm:$0xff]
    %v893 = vld [vmem:[#allocation5 + $0x1a0] sm:$0xff]
    %v894 = vld [vmem:[#allocation5 + $0x1a8] sm:$0xff]
    %v895 = vld [vmem:[#allocation5 + $0x1b0] sm:$0xff]
    %v896 = vld [vmem:[#allocation5 + $0x1b8] sm:$0xff]
    %v897 = vld [vmem:[#allocation5 + $0x1c0] sm:$0xff]
    %v898 = vld [vmem:[#allocation5 + $0x1c8] sm:$0xff]
    %v899 = vld [vmem:[#allocation5 + $0x1d0] sm:$0xff]
    %v900 = vld [vmem:[#allocation5 + $0x1d8] sm:$0xff]
    %v901 = vld [vmem:[#allocation5 + $0x1e0] sm:$0xff]
    %v902 = vld [vmem:[#allocation5 + $0x1e8] sm:$0xff]
    %v903 = vld [vmem:[#allocation5 + $0x1f0] sm:$0xff]
    %v904 = vld [vmem:[#allocation5 + $0x1f8] sm:$0xff]
    %v905 = vld [vmem:[#allocation5 + $0x200] sm:$0xff]
    %v906 = vld [vmem:[#allocation5 + $0x208] sm:$0xff]
    %v907 = vld [vmem:[#allocation5 + $0x210] sm:$0xff]
    %v908 = vld [vmem:[#allocation5 + $0x218] sm:$0xff]
    %v909 = vld [vmem:[#allocation5 + $0x220] sm:$0xff]
    %v910 = vld [vmem:[#allocation5 + $0x228] sm:$0xff]
    %v911 = vld [vmem:[#allocation5 + $0x230] sm:$0xff]
    %v912 = vld [vmem:[#allocation5 + $0x238] sm:$0xff]
    %v913 = vld [vmem:[#allocation5 + $0x240] sm:$0xff]
    %v914 = vld [vmem:[#allocation5 + $0x248] sm:$0xff]
    %v915 = vld [vmem:[#allocation5 + $0x250] sm:$0xff]
    %v916 = vld [vmem:[#allocation5 + $0x258] sm:$0xff]
    %v917 = vld [vmem:[#allocation5 + $0x260] sm:$0xff]
    %v918 = vld [vmem:[#allocation5 + $0x268] sm:$0xff]
    %v919 = vld [vmem:[#allocation5 + $0x270] sm:$0xff]
    %v920 = vld [vmem:[#allocation5 + $0x278] sm:$0xff]
    %v921 = vld [vmem:[#allocation5 + $0x280] sm:$0xff]
    %v922 = vld [vmem:[#allocation5 + $0x288] sm:$0xff]
    %s923 = scalar_lea.vmem [#allocation10], 2
    %v924 = vld [vmem:[%s923] ss:$8 sm:$0x3]
    %v926 = vperm.slane %v924, 0
    %v927 = vperm.slane %v924, 1
    %v1010 = vunpack.c.l.b16 %v843
    %v1011 = vunpack.c.h.b16 %v843
    %v1012 = vunpack.c.l.b16 %v844
    %v1013 = vunpack.c.h.b16 %v844
    %v1014 = vunpack.c.l.b16 %v845
    %v1015 = vunpack.c.h.b16 %v845
    %v1016 = vunpack.c.l.b16 %v846
    %v1017 = vunpack.c.h.b16 %v846
    %v1018 = vunpack.c.l.b16 %v847
    %v1019 = vunpack.c.h.b16 %v847
    %v1020 = vunpack.c.l.b16 %v848
    %v1021 = vunpack.c.h.b16 %v848
    %v1022 = vunpack.c.l.b16 %v849
    %v1023 = vunpack.c.h.b16 %v849
    %v1024 = vunpack.c.l.b16 %v850
    %v1025 = vunpack.c.h.b16 %v850
    %v1026 = vunpack.c.l.b16 %v851
    %v1027 = vunpack.c.h.b16 %v851
    %v1028 = vunpack.c.l.b16 %v852
    %v1029 = vunpack.c.h.b16 %v852
    %v1030 = vunpack.c.l.b16 %v853
    %v1031 = vunpack.c.h.b16 %v853
    %v1032 = vunpack.c.l.b16 %v854
    %v1033 = vunpack.c.h.b16 %v854
    %v1034 = vunpack.c.l.b16 %v855
    %v1035 = vunpack.c.h.b16 %v855
    %v1036 = vunpack.c.l.b16 %v856
    %v1037 = vunpack.c.h.b16 %v856
    %v1038 = vunpack.c.l.b16 %v857
    %v1039 = vunpack.c.h.b16 %v857
    %v1040 = vunpack.c.l.b16 %v858
    %v1041 = vunpack.c.h.b16 %v858
    %v1042 = vunpack.c.l.b16 %v859
    %v1043 = vunpack.c.h.b16 %v859
    %v1044 = vunpack.c.l.b16 %v860
    %v1045 = vunpack.c.h.b16 %v860
    %v1046 = vunpack.c.l.b16 %v861
    %v1047 = vunpack.c.h.b16 %v861
    %v1048 = vunpack.c.l.b16 %v862
    %v1049 = vunpack.c.h.b16 %v862
    %v1050 = vunpack.c.l.b16 %v863
    %v1051 = vunpack.c.h.b16 %v863
    %v1052 = vunpack.c.l.b16 %v864
    %v1053 = vunpack.c.h.b16 %v864
    %v1054 = vunpack.c.l.b16 %v865
    %v1055 = vunpack.c.h.b16 %v865
    %v1056 = vunpack.c.l.b16 %v866
    %v1057 = vunpack.c.h.b16 %v866
    %v1058 = vunpack.c.l.b16 %v867
    %v1059 = vunpack.c.h.b16 %v867
    %v1060 = vunpack.c.l.b16 %v868
    %v1061 = vunpack.c.h.b16 %v868
    %v1062 = vunpack.c.l.b16 %v869
    %v1063 = vunpack.c.h.b16 %v869
    %v1064 = vunpack.c.l.b16 %v870
    %v1065 = vunpack.c.h.b16 %v870
    %v1066 = vunpack.c.l.b16 %v871
    %v1067 = vunpack.c.h.b16 %v871
    %v1068 = vunpack.c.l.b16 %v872
    %v1069 = vunpack.c.h.b16 %v872
    %v1070 = vunpack.c.l.b16 %v873
    %v1071 = vunpack.c.h.b16 %v873
    %v1072 = vunpack.c.l.b16 %v874
    %v1073 = vunpack.c.h.b16 %v874
    %v1074 = vunpack.c.l.b16 %v875
    %v1075 = vunpack.c.h.b16 %v875
    %v1076 = vunpack.c.l.b16 %v876
    %v1077 = vunpack.c.h.b16 %v876
    %v1078 = vunpack.c.l.b16 %v877
    %v1079 = vunpack.c.h.b16 %v877
    %v1080 = vunpack.c.l.b16 %v878
    %v1081 = vunpack.c.h.b16 %v878
    %v1082 = vunpack.c.l.b16 %v879
    %v1083 = vunpack.c.h.b16 %v879
    %v1084 = vunpack.c.l.b16 %v880
    %v1085 = vunpack.c.h.b16 %v880
    %v1086 = vunpack.c.l.b16 %v881
    %v1087 = vunpack.c.h.b16 %v881
    %v1088 = vunpack.c.l.b16 %v882
    %v1089 = vunpack.c.h.b16 %v882
    %v1090 = vunpack.c.l.b16 %v883
    %v1091 = vunpack.c.h.b16 %v883
    %v1092 = vunpack.c.l.b16 %v884
    %v1093 = vunpack.c.h.b16 %v884
    %v1094 = vunpack.c.l.b16 %v885
    %v1095 = vunpack.c.h.b16 %v885
    %v1096 = vunpack.c.l.b16 %v886
    %v1097 = vunpack.c.h.b16 %v886
    %v1098 = vunpack.c.l.b16 %v887
    %v1099 = vunpack.c.h.b16 %v887
    %v1100 = vunpack.c.l.b16 %v888
    %v1101 = vunpack.c.h.b16 %v888
    %v1102 = vunpack.c.l.b16 %v889
    %v1103 = vunpack.c.h.b16 %v889
    %v1104 = vunpack.c.l.b16 %v890
    %v1105 = vunpack.c.h.b16 %v890
    %v1106 = vunpack.c.l.b16 %v891
    %v1107 = vunpack.c.h.b16 %v891
    %v1108 = vunpack.c.l.b16 %v892
    %v1109 = vunpack.c.h.b16 %v892
    %v1110 = vunpack.c.l.b16 %v893
    %v1111 = vunpack.c.h.b16 %v893
    %v1112 = vunpack.c.l.b16 %v894
    %v1113 = vunpack.c.h.b16 %v894
    %v1114 = vunpack.c.l.b16 %v895
    %v1115 = vunpack.c.h.b16 %v895
    %v1116 = vunpack.c.l.b16 %v896
    %v1117 = vunpack.c.h.b16 %v896
    %v1118 = vunpack.c.l.b16 %v897
    %v1119 = vunpack.c.h.b16 %v897
    %v1120 = vunpack.c.l.b16 %v898
    %v1121 = vunpack.c.h.b16 %v898
    %v1122 = vunpack.c.l.b16 %v899
    %v1123 = vunpack.c.h.b16 %v899
    %v1124 = vunpack.c.l.b16 %v900
    %v1125 = vunpack.c.h.b16 %v900
    %v1126 = vunpack.c.l.b16 %v901
    %v1127 = vunpack.c.h.b16 %v901
    %v1128 = vunpack.c.l.b16 %v902
    %v1129 = vunpack.c.h.b16 %v902
    %v1130 = vunpack.c.l.b16 %v903
    %v1131 = vunpack.c.h.b16 %v903
    %v1132 = vunpack.c.l.b16 %v904
    %v1133 = vunpack.c.h.b16 %v904
    %v1134 = vunpack.c.l.b16 %v905
    %v1135 = vunpack.c.h.b16 %v905
    %v1136 = vunpack.c.l.b16 %v906
    %v1137 = vunpack.c.h.b16 %v906
    %v1138 = vunpack.c.l.b16 %v907
    %v1139 = vunpack.c.h.b16 %v907
    %v1140 = vunpack.c.l.b16 %v908
    %v1141 = vunpack.c.h.b16 %v908
    %v1142 = vunpack.c.l.b16 %v909
    %v1143 = vunpack.c.h.b16 %v909
    %v1144 = vunpack.c.l.b16 %v910
    %v1145 = vunpack.c.h.b16 %v910
    %v1146 = vunpack.c.l.b16 %v911
    %v1147 = vunpack.c.h.b16 %v911
    %v1148 = vunpack.c.l.b16 %v912
    %v1149 = vunpack.c.h.b16 %v912
    %v1150 = vunpack.c.l.b16 %v913
    %v1151 = vunpack.c.h.b16 %v913
    %v1152 = vunpack.c.l.b16 %v914
    %v1153 = vunpack.c.h.b16 %v914
    %v1154 = vunpack.c.l.b16 %v915
    %v1155 = vunpack.c.h.b16 %v915
    %v1156 = vunpack.c.l.b16 %v916
    %v1157 = vunpack.c.h.b16 %v916
    %v1158 = vunpack.c.l.b16 %v917
    %v1159 = vunpack.c.h.b16 %v917
    %v1160 = vunpack.c.l.b16 %v918
    %v1161 = vunpack.c.h.b16 %v918
    %v1162 = vunpack.c.l.b16 %v919
    %v1163 = vunpack.c.h.b16 %v919
    %v1164 = vunpack.c.l.b16 %v920
    %v1165 = vunpack.c.h.b16 %v920
    %v1166 = vunpack.c.l.b16 %v921
    %v1167 = vunpack.c.h.b16 %v921
    %v1168 = vunpack.c.l.b16 %v922
    %v1169 = vunpack.c.h.b16 %v922
    %v1170 = vpack.c.b16 %v1012, %v1010
    %v1171 = vpack.c.b16 %v1013, %v1011
    %v1172 = vpack.c.b16 %v1016, %v1014
    %v1173 = vpack.c.b16 %v1017, %v1015
    %v1174 = vpack.c.b16 %v1020, %v1018
    %v1175 = vpack.c.b16 %v1021, %v1019
    %v1176 = vpack.c.b16 %v1024, %v1022
    %v1177 = vpack.c.b16 %v1025, %v1023
    %v1178 = vpack.c.b16 %v1028, %v1026
    %v1179 = vpack.c.b16 %v1029, %v1027
    %v1180 = vpack.c.b16 %v1032, %v1030
    %v1181 = vpack.c.b16 %v1033, %v1031
    %v1182 = vpack.c.b16 %v1036, %v1034
    %v1183 = vpack.c.b16 %v1037, %v1035
    %v1184 = vpack.c.b16 %v1040, %v1038
    %v1185 = vpack.c.b16 %v1041, %v1039
    %v1186 = vpack.c.b16 %v1044, %v1042
    %v1187 = vpack.c.b16 %v1045, %v1043
    %v1188 = vpack.c.b16 %v1048, %v1046
    %v1189 = vpack.c.b16 %v1049, %v1047
    %v1190 = vpack.c.b16 %v1052, %v1050
    %v1191 = vpack.c.b16 %v1053, %v1051
    %v1192 = vpack.c.b16 %v1056, %v1054
    %v1193 = vpack.c.b16 %v1057, %v1055
    %v1194 = vpack.c.b16 %v1060, %v1058
    %v1195 = vpack.c.b16 %v1061, %v1059
    %v1196 = vpack.c.b16 %v1064, %v1062
    %v1197 = vpack.c.b16 %v1065, %v1063
    %v1198 = vpack.c.b16 %v1068, %v1066
    %v1199 = vpack.c.b16 %v1069, %v1067
    %v1200 = vpack.c.b16 %v1072, %v1070
    %v1201 = vpack.c.b16 %v1073, %v1071
    %v1202 = vpack.c.b16 %v1076, %v1074
    %v1203 = vpack.c.b16 %v1077, %v1075
    %v1204 = vpack.c.b16 %v1080, %v1078
    %v1205 = vpack.c.b16 %v1081, %v1079
    %v1206 = vpack.c.b16 %v1084, %v1082
    %v1207 = vpack.c.b16 %v1085, %v1083
    %v1208 = vpack.c.b16 %v1088, %v1086
    %v1209 = vpack.c.b16 %v1089, %v1087
    %v1210 = vpack.c.b16 %v1092, %v1090
    %v1211 = vpack.c.b16 %v1093, %v1091
    %v1212 = vpack.c.b16 %v1096, %v1094
    %v1213 = vpack.c.b16 %v1097, %v1095
    %v1214 = vpack.c.b16 %v1100, %v1098
    %v1215 = vpack.c.b16 %v1101, %v1099
    %v1216 = vpack.c.b16 %v1104, %v1102
    %v1217 = vpack.c.b16 %v1105, %v1103
    %v1218 = vpack.c.b16 %v1108, %v1106
    %v1219 = vpack.c.b16 %v1109, %v1107
    %v1220 = vpack.c.b16 %v1112, %v1110
    %v1221 = vpack.c.b16 %v1113, %v1111
    %v1222 = vpack.c.b16 %v1116, %v1114
    %v1223 = vpack.c.b16 %v1117, %v1115
    %v1224 = vpack.c.b16 %v1120, %v1118
    %v1225 = vpack.c.b16 %v1121, %v1119
    %v1226 = vpack.c.b16 %v1124, %v1122
    %v1227 = vpack.c.b16 %v1125, %v1123
    %v1228 = vpack.c.b16 %v1128, %v1126
    %v1229 = vpack.c.b16 %v1129, %v1127
    %v1230 = vpack.c.b16 %v1132, %v1130
    %v1231 = vpack.c.b16 %v1133, %v1131
    %v1232 = vpack.c.b16 %v1136, %v1134
    %v1233 = vpack.c.b16 %v1137, %v1135
    %v1234 = vpack.c.b16 %v1140, %v1138
    %v1235 = vpack.c.b16 %v1141, %v1139
    %v1236 = vpack.c.b16 %v1144, %v1142
    %v1237 = vpack.c.b16 %v1145, %v1143
    %v1238 = vpack.c.b16 %v1148, %v1146
    %v1239 = vpack.c.b16 %v1149, %v1147
    %v1240 = vpack.c.b16 %v1152, %v1150
    %v1241 = vpack.c.b16 %v1153, %v1151
    %v1242 = vpack.c.b16 %v1156, %v1154
    %v1243 = vpack.c.b16 %v1157, %v1155
    %v1244 = vpack.c.b16 %v1160, %v1158
    %v1245 = vpack.c.b16 %v1161, %v1159
    %v1246 = vpack.c.b16 %v1164, %v1162
    %v1247 = vpack.c.b16 %v1165, %v1163
    %v1248 = vpack.c.b16 %v1168, %v1166
    %v1249 = vpack.c.b16 %v1169, %v1167
    %1330 = vmatpush.bf16.msra.mxu0 %v1184
    %1331 = vmatpush.bf16.msra.mxu0 %v1182
    %1332 = vmatpush.bf16.msra.mxu0 %v1180
    %1333 = vmatpush.bf16.msra.mxu0 %v1178
    %1334 = vmatpush.bf16.msra.mxu0 %v1176
    %1335 = vmatpush.bf16.msra.mxu0 %v1174
    %1336 = vmatpush.bf16.msra.mxu0 %v1172
    %1337 = vmatpush.bf16.msra.mxu0 %v1170
    %1338 = vmatmul.bf16.gmra.mxu0 %v838
    %v1339 = vpop.f32.mrf.mxu0
    %v1340 = vadd.f32 %v926, %v1339
    %v1341 = vpop.f32.mrf.mxu0
    %v1342 = vadd.f32 %v926, %v1341
    %1343 = vdwg.mxu0
    %1344 = vmatpush.bf16.msra.mxu0 %v1200
    %1345 = vmatpush.bf16.msra.mxu0 %v1198
    %1346 = vmatpush.bf16.msra.mxu0 %v1196
    %1347 = vmatpush.bf16.msra.mxu0 %v1194
    %1348 = vmatpush.bf16.msra.mxu0 %v1192
    %1349 = vmatpush.bf16.msra.mxu0 %v1190
    %1350 = vmatpush.bf16.msra.mxu0 %v1188
    %1351 = vmatpush.bf16.msra.mxu0 %v1186
    %1352 = vmatmul.bf16.gmra.mxu0 %v839
    %v1353 = vpop.f32.mrf.mxu0
    %v1354 = vadd.f32 %v1340, %v1353
    %v1355 = vpop.f32.mrf.mxu0
    %v1356 = vadd.f32 %v1342, %v1355
    %1357 = vdwg.mxu0
    %1358 = vmatpush.bf16.msra.mxu0 %v1216
    %1359 = vmatpush.bf16.msra.mxu0 %v1214
    %1360 = vmatpush.bf16.msra.mxu0 %v1212
    %1361 = vmatpush.bf16.msra.mxu0 %v1210
    %1362 = vmatpush.bf16.msra.mxu0 %v1208
    %1363 = vmatpush.bf16.msra.mxu0 %v1206
    %1364 = vmatpush.bf16.msra.mxu0 %v1204
    %1365 = vmatpush.bf16.msra.mxu0 %v1202
    %1366 = vmatmul.bf16.gmra.mxu0 %v840
    %v1367 = vpop.f32.mrf.mxu0
    %v1368 = vadd.f32 %v1354, %v1367
    %v1369 = vpop.f32.mrf.mxu0
    %v1370 = vadd.f32 %v1356, %v1369
    %1371 = vdwg.mxu0
    %1372 = vmatpush.bf16.msra.mxu0 %v1232
    %1373 = vmatpush.bf16.msra.mxu0 %v1230
    %1374 = vmatpush.bf16.msra.mxu0 %v1228
    %1375 = vmatpush.bf16.msra.mxu0 %v1226
    %1376 = vmatpush.bf16.msra.mxu0 %v1224
    %1377 = vmatpush.bf16.msra.mxu0 %v1222
    %1378 = vmatpush.bf16.msra.mxu0 %v1220
    %1379 = vmatpush.bf16.msra.mxu0 %v1218
    %1380 = vmatmul.bf16.gmra.mxu0 %v841
    %v1381 = vpop.f32.mrf.mxu0
    %v1382 = vadd.f32 %v1368, %v1381
    %v1383 = vpop.f32.mrf.mxu0
    %v1384 = vadd.f32 %v1370, %v1383
    %1385 = vdwg.mxu0
    %1386 = vmatpush.bf16.msra.mxu0 %v1248
    %1387 = vmatpush.bf16.msra.mxu0 %v1246
    %1388 = vmatpush.bf16.msra.mxu0 %v1244
    %1389 = vmatpush.bf16.msra.mxu0 %v1242
    %1390 = vmatpush.bf16.msra.mxu0 %v1240
    %1391 = vmatpush.bf16.msra.mxu0 %v1238
    %1392 = vmatpush.bf16.msra.mxu0 %v1236
    %1393 = vmatpush.bf16.msra.mxu0 %v1234
    %1394 = vmatmul.bf16.gmra.mxu0 %v842
    %v1395 = vpop.f32.mrf.mxu0
    %v1396 = vadd.f32 %v1382, %v1395
    %v1397 = vpop.f32.mrf.mxu0
    %v1398 = vadd.f32 %v1384, %v1397
    %1399 = vdwg.mxu0
    %1400 = vmatpush.bf16.msra.mxu0 %v1185
    %1401 = vmatpush.bf16.msra.mxu0 %v1183
    %1402 = vmatpush.bf16.msra.mxu0 %v1181
    %1403 = vmatpush.bf16.msra.mxu0 %v1179
    %1404 = vmatpush.bf16.msra.mxu0 %v1177
    %1405 = vmatpush.bf16.msra.mxu0 %v1175
    %1406 = vmatpush.bf16.msra.mxu0 %v1173
    %1407 = vmatpush.bf16.msra.mxu0 %v1171
    %1408 = vmatmul.bf16.gmra.mxu0 %v838
    %v1409 = vpop.f32.mrf.mxu0
    %v1410 = vadd.f32 %v927, %v1409
    %v1411 = vpop.f32.mrf.mxu0
    %v1412 = vadd.f32 %v927, %v1411
    %1413 = vdwg.mxu0
    %1414 = vmatpush.bf16.msra.mxu0 %v1201
    %1415 = vmatpush.bf16.msra.mxu0 %v1199
    %1416 = vmatpush.bf16.msra.mxu0 %v1197
    %1417 = vmatpush.bf16.msra.mxu0 %v1195
    %1418 = vmatpush.bf16.msra.mxu0 %v1193
    %1419 = vmatpush.bf16.msra.mxu0 %v1191
    %1420 = vmatpush.bf16.msra.mxu0 %v1189
    %1421 = vmatpush.bf16.msra.mxu0 %v1187
    %1422 = vmatmul.bf16.gmra.mxu0 %v839
    %v1423 = vpop.f32.mrf.mxu0
    %v1424 = vadd.f32 %v1410, %v1423
    %v1425 = vpop.f32.mrf.mxu0
    %v1426 = vadd.f32 %v1412, %v1425
    %1427 = vdwg.mxu0
    %1428 = vmatpush.bf16.msra.mxu0 %v1217
    %1429 = vmatpush.bf16.msra.mxu0 %v1215
    %1430 = vmatpush.bf16.msra.mxu0 %v1213
    %1431 = vmatpush.bf16.msra.mxu0 %v1211
    %1432 = vmatpush.bf16.msra.mxu0 %v1209
    %1433 = vmatpush.bf16.msra.mxu0 %v1207
    %1434 = vmatpush.bf16.msra.mxu0 %v1205
    %1435 = vmatpush.bf16.msra.mxu0 %v1203
    %1436 = vmatmul.bf16.gmra.mxu0 %v840
    %v1437 = vpop.f32.mrf.mxu0
    %v1438 = vadd.f32 %v1424, %v1437
    %v1439 = vpop.f32.mrf.mxu0
    %v1440 = vadd.f32 %v1426, %v1439
    %1441 = vdwg.mxu0
    %1442 = vmatpush.bf16.msra.mxu0 %v1233
    %1443 = vmatpush.bf16.msra.mxu0 %v1231
    %1444 = vmatpush.bf16.msra.mxu0 %v1229
    %1445 = vmatpush.bf16.msra.mxu0 %v1227
    %1446 = vmatpush.bf16.msra.mxu0 %v1225
    %1447 = vmatpush.bf16.msra.mxu0 %v1223
    %1448 = vmatpush.bf16.msra.mxu0 %v1221
    %1449 = vmatpush.bf16.msra.mxu0 %v1219
    %1450 = vmatmul.bf16.gmra.mxu0 %v841
    %v1451 = vpop.f32.mrf.mxu0
    %v1452 = vadd.f32 %v1438, %v1451
    %v1453 = vpop.f32.mrf.mxu0
    %v1454 = vadd.f32 %v1440, %v1453
    %1455 = vdwg.mxu0
    %1456 = vmatpush.bf16.msra.mxu0 %v1249
    %1457 = vmatpush.bf16.msra.mxu0 %v1247
    %1458 = vmatpush.bf16.msra.mxu0 %v1245
    %1459 = vmatpush.bf16.msra.mxu0 %v1243
    %1460 = vmatpush.bf16.msra.mxu0 %v1241
    %1461 = vmatpush.bf16.msra.mxu0 %v1239
    %1462 = vmatpush.bf16.msra.mxu0 %v1237
    %1463 = vmatpush.bf16.msra.mxu0 %v1235
    %1464 = vmatmul.bf16.gmra.mxu0 %v842
    %v1465 = vpop.f32.mrf.mxu0
    %v1466 = vadd.f32 %v1452, %v1465
    %v1467 = vpop.f32.mrf.mxu0
    %v1468 = vadd.f32 %v1454, %v1467
    %1469 = vdwg.mxu0
    %v1470 = vmax.f32 %v1396, 0.0
    %v1471 = vmax.f32 %v1466, 0.0
    %v1472 = vmax.f32 %v1398, 0.0
    %v1473 = vmax.f32 %v1468, 0.0
    %v1474 = vpack.c.bf16 %v1472, %v1470
    %v1475 = vpack.c.bf16 %v1473, %v1471
    %v1476 = vld [vmem:[#allocation8] sm:$0xf]
    %v1477 = vld [vmem:[#allocation8 + $0x4] sm:$0xf]
    %v1478 = vld [vmem:[#allocation8 + $0x8] sm:$0xf]
    %v1479 = vld [vmem:[#allocation8 + $0xc] sm:$0xf]
    %v1480 = vld [vmem:[#allocation8 + $0x10] sm:$0xf]
    %v1481 = vld [vmem:[#allocation8 + $0x14] sm:$0xf]
    %v1482 = vld [vmem:[#allocation8 + $0x18] sm:$0xf]
    %v1483 = vld [vmem:[#allocation8 + $0x1c] sm:$0xf]
    %v1484 = vld [vmem:[#allocation8 + $0x20] sm:$0xf]
    %v1485 = vld [vmem:[#allocation8 + $0x24] sm:$0xf]
    %v1486 = vld [vmem:[#allocation8 + $0x28] sm:$0xf]
    %v1487 = vld [vmem:[#allocation8 + $0x2c] sm:$0xf]
    %v1488 = vld [vmem:[#allocation8 + $0x30] sm:$0xf]
    %v1489 = vld [vmem:[#allocation8 + $0x34] sm:$0xf]
    %v1490 = vld [vmem:[#allocation8 + $0x38] sm:$0xf]
    %v1491 = vld [vmem:[#allocation8 + $0x3c] sm:$0xf]
    %v1492 = vld [vmem:[#allocation8 + $0x40] sm:$0xf]
    %v1493 = vld [vmem:[#allocation8 + $0x44] sm:$0xf]
    %v1494 = vld [vmem:[#allocation8 + $0x48] sm:$0xf]
    %v1495 = vld [vmem:[#allocation8 + $0x4c] sm:$0xf]
    %v1496 = vld [vmem:[#allocation8 + $0x50] sm:$0xf]
    %v1497 = vld [vmem:[#allocation8 + $0x54] sm:$0xf]
    %v1498 = vld [vmem:[#allocation8 + $0x58] sm:$0xf]
    %v1499 = vld [vmem:[#allocation8 + $0x5c] sm:$0xf]
    %v1500 = vld [vmem:[#allocation8 + $0x60] sm:$0xf]
    %v1501 = vld [vmem:[#allocation8 + $0x64] sm:$0xf]
    %v1502 = vld [vmem:[#allocation8 + $0x68] sm:$0xf]
    %v1503 = vld [vmem:[#allocation8 + $0x6c] sm:$0xf]
    %v1504 = vld [vmem:[#allocation8 + $0x70] sm:$0xf]
    %v1505 = vld [vmem:[#allocation8 + $0x74] sm:$0xf]
    %v1506 = vld [vmem:[#allocation8 + $0x78] sm:$0xf]
    %v1507 = vld [vmem:[#allocation8 + $0x7c] sm:$0xf]
    %v1508 = vld [vmem:[#allocation10 + $0x3] ss:$0 sm:$0xff]
    %v1541 = vunpack.c.l.b16 %v1476
    %v1542 = vunpack.c.l.b16 %v1477
    %v1543 = vunpack.c.l.b16 %v1478
    %v1544 = vunpack.c.l.b16 %v1479
    %v1545 = vunpack.c.l.b16 %v1480
    %v1546 = vunpack.c.l.b16 %v1481
    %v1547 = vunpack.c.l.b16 %v1482
    %v1548 = vunpack.c.l.b16 %v1483
    %v1549 = vunpack.c.l.b16 %v1484
    %v1550 = vunpack.c.l.b16 %v1485
    %v1551 = vunpack.c.l.b16 %v1486
    %v1552 = vunpack.c.l.b16 %v1487
    %v1553 = vunpack.c.l.b16 %v1488
    %v1554 = vunpack.c.l.b16 %v1489
    %v1555 = vunpack.c.l.b16 %v1490
    %v1556 = vunpack.c.l.b16 %v1491
    %v1557 = vunpack.c.l.b16 %v1492
    %v1558 = vunpack.c.l.b16 %v1493
    %v1559 = vunpack.c.l.b16 %v1494
    %v1560 = vunpack.c.l.b16 %v1495
    %v1561 = vunpack.c.l.b16 %v1496
    %v1562 = vunpack.c.l.b16 %v1497
    %v1563 = vunpack.c.l.b16 %v1498
    %v1564 = vunpack.c.l.b16 %v1499
    %v1565 = vunpack.c.l.b16 %v1500
    %v1566 = vunpack.c.l.b16 %v1501
    %v1567 = vunpack.c.l.b16 %v1502
    %v1568 = vunpack.c.l.b16 %v1503
    %v1569 = vunpack.c.l.b16 %v1504
    %v1570 = vunpack.c.l.b16 %v1505
    %v1571 = vunpack.c.l.b16 %v1506
    %v1572 = vunpack.c.l.b16 %v1507
    %v1573 = vpack.c.b16 %v1542, %v1541
    %v1574 = vpack.c.b16 %v1544, %v1543
    %v1575 = vpack.c.b16 %v1546, %v1545
    %v1576 = vpack.c.b16 %v1548, %v1547
    %v1577 = vpack.c.b16 %v1550, %v1549
    %v1578 = vpack.c.b16 %v1552, %v1551
    %v1579 = vpack.c.b16 %v1554, %v1553
    %v1580 = vpack.c.b16 %v1556, %v1555
    %v1581 = vpack.c.b16 %v1558, %v1557
    %v1582 = vpack.c.b16 %v1560, %v1559
    %v1583 = vpack.c.b16 %v1562, %v1561
    %v1584 = vpack.c.b16 %v1564, %v1563
    %v1585 = vpack.c.b16 %v1566, %v1565
    %v1586 = vpack.c.b16 %v1568, %v1567
    %v1587 = vpack.c.b16 %v1570, %v1569
    %v1588 = vpack.c.b16 %v1572, %v1571
    %1605 = vmatpush.bf16.msra.mxu0 %v1580
    %1606 = vmatpush.bf16.msra.mxu0 %v1579
    %1607 = vmatpush.bf16.msra.mxu0 %v1578
    %1608 = vmatpush.bf16.msra.mxu0 %v1577
    %1609 = vmatpush.bf16.msra.mxu0 %v1576
    %1610 = vmatpush.bf16.msra.mxu0 %v1575
    %1611 = vmatpush.bf16.msra.mxu0 %v1574
    %1612 = vmatpush.bf16.msra.mxu0 %v1573
    %1613 = vmatmul.bf16.gmra.mxu0 %v1474
    %v1614 = vpop.f32.mrf.mxu0
    %v1615 = vadd.f32 %v1508, %v1614
    %v1616 = vpop.f32.mrf.mxu0
    %v1617 = vadd.f32 %v1508, %v1616
    %1618 = vdwg.mxu0
    %1619 = vmatpush.bf16.msra.mxu0 %v1588
    %1620 = vmatpush.bf16.msra.mxu0 %v1587
    %1621 = vmatpush.bf16.msra.mxu0 %v1586
    %1622 = vmatpush.bf16.msra.mxu0 %v1585
    %1623 = vmatpush.bf16.msra.mxu0 %v1584
    %1624 = vmatpush.bf16.msra.mxu0 %v1583
    %1625 = vmatpush.bf16.msra.mxu0 %v1582
    %1626 = vmatpush.bf16.msra.mxu0 %v1581
    %1627 = vmatmul.bf16.gmra.mxu0 %v1475
    %v1628 = vpop.f32.mrf.mxu0
    %v1629 = vadd.f32 %v1615, %v1628
    %v1630 = vpop.f32.mrf.mxu0
    %v1631 = vadd.f32 %v1617, %v1630
    %1632 = vdwg.mxu0
    %v1633 = vmax.f32 %v1629, 0.0
    %v1634 = vmax.f32 %v1631, 0.0
    %1635 = vxpose.xlu0.b32.start [1/16] %v1633, 128
    %1636 = vxpose.xlu0.b32.cont [2/16] %v1634, 128
    %1637 = vxpose.xlu0.b32.cont [3/16] 0.0, 128
    %1638 = vxpose.xlu0.b32.cont [4/16] 0.0, 128
    %1639 = vxpose.xlu0.b32.cont [5/16] 0.0, 128
    %1640 = vxpose.xlu0.b32.cont [6/16] 0.0, 128
    %1641 = vxpose.xlu0.b32.cont [7/16] 0.0, 128
    %1642 = vxpose.xlu0.b32.cont [8/16] 0.0, 128
    %1643 = vxpose.xlu0.b32.cont [9/16] 0.0, 128
    %1644 = vxpose.xlu0.b32.cont [10/16] 0.0, 128
    %1645 = vxpose.xlu0.b32.cont [11/16] 0.0, 128
    %1646 = vxpose.xlu0.b32.cont [12/16] 0.0, 128
    %1647 = vxpose.xlu0.b32.cont [13/16] 0.0, 128
    %1648 = vxpose.xlu0.b32.cont [14/16] 0.0, 128
    %1649 = vxpose.xlu0.b32.cont [15/16] 0.0, 128
    %1650 = vxpose.xlu0.b32.end [16/16] 0.0, 128
    %v1651 = vpop.trf.xlu0
    %v1652 = vpop.trf.xlu0
    %v1653 = vpop.trf.xlu0
    %v1654 = vpop.trf.xlu0
    %v1655 = vpop.trf.xlu0
    %v1656 = vpop.trf.xlu0
    %v1657 = vpop.trf.xlu0
    %v1658 = vpop.trf.xlu0
    %v1659 = vpop.trf.xlu0
    %v1660 = vpop.trf.xlu0
    %v1661 = vpop.trf.xlu0
    %v1662 = vpop.trf.xlu0
    %v1663 = vpop.trf.xlu0
    %v1664 = vpop.trf.xlu0
    %v1665 = vpop.trf.xlu0
    %v1666 = vpop.trf.xlu0
    %v1667 = vpack.c.bf16 %v1652, %v1651
    %v1668 = vpack.c.bf16 %v1654, %v1653
    %v1669 = vpack.c.bf16 %v1656, %v1655
    %v1670 = vpack.c.bf16 %v1658, %v1657
    %v1671 = vpack.c.bf16 %v1660, %v1659
    %v1672 = vpack.c.bf16 %v1662, %v1661
    %v1673 = vpack.c.bf16 %v1664, %v1663
    %v1674 = vpack.c.bf16 %v1666, %v1665
    %v1675 = vld [vmem:[#allocation8 + $0x80] sm:$0xf]
    %v1676 = vld [vmem:[#allocation8 + $0x84] sm:$0xf]
    %v1679 = vunpack.c.l.b16 %v1675
    %v1680 = vunpack.c.l.b16 %v1676
    %v1681 = vpack.c.b16 %v1680, %v1679
    %1683 = vmatpush.bf16.msra.mxu0 %v1674
    %1684 = vmatpush.bf16.msra.mxu0 %v1673
    %1685 = vmatpush.bf16.msra.mxu0 %v1672
    %1686 = vmatpush.bf16.msra.mxu0 %v1671
    %1687 = vmatpush.bf16.msra.mxu0 %v1670
    %1688 = vmatpush.bf16.msra.mxu0 %v1669
    %1689 = vmatpush.bf16.msra.mxu0 %v1668
    %1690 = vmatpush.bf16.msra.mxu0 %v1667
    %1691 = vmatmul.bf16.gmra.mxu0 %v1681
    %v1692 = vpop.f32.mrf.mxu0
    %v1693 = vadd.f32 0.0, %v1692
    %v1694 = vpop.f32.mrf.mxu0
    %1695 = vdwg.mxu0
    %v1696 = vld [vmem:[#allocation10 + $0x4] ss:$0 sm:$0xff]
    %1698 = vset.pattern.permute.xlu0 0
    %1699 = vperm.xlu0 %1698, %v1696
    %v1700 = vpop.permute.xlu0 %1699
    %v1702 = vadd.f32 %v1693, %v1700
    %vm1703 = vcmask 122880
    %1704 = vst.msk [vmem:[#allocation11] sm:$0x1] %vm1703, %v1702
    // Predicated region
    $region42: #{tpu_custom_call.1} parent=1 // pred_check
      _
    $region43: #{tpu_custom_call.1} parent=1 // pred_check_branch
      %1706 = sbr.rel (0) target = $region45
    $region44: #{tpu_custom_call.1} parent=1 // pred_region
      %1708 = vsyncadd [#allocation4], 0
      %s1710 = sshll.u32 [#allocation11], 4
      %s1711 = int_to_ptr.vmem [resolvable:$true] %s1710
      %s1712 = sshll.u32 %s5, 4
      %s1713 = int_to_ptr.hbm [resolvable:$true] %s1712
      %1715 = dma.vmem_to_hbm [thread:$0]  %s1711, 16, %s1713, [#allocation4]
    $region45: #{tpu_custom_call.1} parent=1 // pred_fallthru
      _
    // Predicated region
    $region46: #{tpu_custom_call.1} parent=1 // pred_check
      _
    $region47: #{tpu_custom_call.1} parent=1 // pred_check_branch
      %1717 = sbr.rel (0) target = $region49
    $region48: #{tpu_custom_call.1} parent=1 // pred_region
      %1719 = dma.done [#allocation4], 16
    $region49: #{tpu_custom_call.1} parent=1 // pred_fallthru
      _
    %1720 = vsyncpa [#allocation3], 1
    %1721 = vsyncpa [#allocation6], 1
    %1722 = vsyncpa [#allocation9], 1
    %1723 = vsyncpa [#allocation4], 1

</llo_original>
